<compile_context>
chip_gen: v7x
topology: tpu7x:2x2x1
jax: 0.10.0
libtpu: 0.0.40
codegen_flags: <defaults>
</compile_context>

<pallas_src>
import jax
import jax.numpy as jnp
import numpy as np
from jax.experimental import pallas as pl
from jax.experimental.pallas import tpu as pltpu  # noqa: F401  (TPU backend assumed)

# ----------------------------- model config ---------------------------------
LEN_ALPHABET = 24          # global `len_alphabet` in the original script
LATENT_DIM = 32            # latent_dimension
GRU_STACK_SIZE = 2         # gru_stack_size (num GRU layers; kernel specialized for 2)
GRU_NEURONS = 32           # gru_neurons_num (hidden size)
SEQ_LEN = 8
BATCH = 2


# ----------------------------- Pallas kernel --------------------------------
def make_vae_decode_kernel(S, B, D, H):
    """Fused 2-layer GRU wavefront + FC head for static (S, B, D, H)."""
    G3 = 3 * H                     # width of one gate triple (r|z|n)

    def kernel(z_ref, h_ref, wbig_ref, bias_ref, fcw_ref, fcb_ref,
               dec_ref, hT_ref):
        f32 = jnp.float32

        # ---- one-time setup, hoisted off the recurrent path -----------------
        z_all = z_ref[...]                                   # (S*B, D)
        z_steps = [z_all[t * B:(t + 1) * B, :] for t in range(S)]

        w_big = wbig_ref[...]                                # (3H+D, 6H)

        # Per-row-block bias broadcast once to (2B, 6H):
        #   rows 0:B  (layer 0) -> [b_hh_l0 | b_ih_l0]
        #   rows B:2B (layer 1) -> [b_hh_l1 | b_ih_l1]
        bias_cat = jnp.concatenate(
            [jnp.broadcast_to(bias_ref[0:1, :], (B, 2 * G3)),
             jnp.broadcast_to(bias_ref[1:2, :], (B, 2 * G3))], axis=0)

        zeros_bh = jnp.zeros((B, H), f32)
        zeros_b2h = jnp.zeros((B, 2 * H), f32)
        zeros_bd = jnp.zeros((B, D), f32)

        hcat = h_ref[...]                                    # (2B, H) = [h0; h1]
        l1_outs = []

        # ---- wavefront: diagonal d = layer-0 step d, layer-1 step d-1 --------
        for d in range(S + 1):
            td = min(d, S - 1)       # dummy z slab at d == S (its result is discarded)
            h0 = hcat[:B]            # layer-0 state == layer-1 input for step d-1
            h1 = hcat[B:]

            # LHS column blocks (contraction width 3H + D):
            #   layer-0 rows: [ h0 |  0 |  0 | z_d ]
            #   layer-1 rows: [  0 | h1 | x1 |  0  ]   (x1 = h0)
            top = jnp.concatenate([h0, zeros_b2h, z_steps[td]], axis=1)
            bot = jnp.concatenate([zeros_bh, h1, h0, zeros_bd], axis=1)
            lhs = jnp.concatenate([top, bot], axis=0)        # (2B, 3H+D)

            # Single MXU push per diagonal; gives both layers' gi and gh at once.
            fused = jnp.dot(lhs, w_big, preferred_element_type=f32) + bias_cat
            gh = fused[:, :G3]       # hidden-path gates (r|z|n), both layers
            gi = fused[:, G3:]       # input-path  gates (r|z|n), both layers

            # Two EUP pushes per diagonal (sigmoid over r&z slab, then tanh).
            rz = jax.nn.sigmoid(gi[:, :2 * H] + gh[:, :2 * H])
            r = rz[:, :H]
            zg = rz[:, H:]
            n = jnp.tanh(gi[:, 2 * H:] + r * gh[:, 2 * H:])  # b_hn lives inside gh_n
            h_new = (1.0 - zg) * n + zg * hcat               # (2B, H)

            if d == 0:                     # layer-1 inactive: keep its initial state
                hcat = jnp.concatenate([h_new[:B], hcat[B:]], axis=0)
            elif d < S:                    # both layers active
                l1_outs.append(h_new[B:])
                hcat = h_new
            else:                          # d == S: layer-0 inactive
                l1_outs.append(h_new[B:])
                h0_final = hcat[:B]        # h0 after step S-1 (set at diagonal S-1)
                h1_final = h_new[B:]

        # ---- fused Linear head over all timesteps at once --------------------
        x_fc = jnp.concatenate(l1_outs, axis=0)              # (S*B, H), step-major
        dec_ref[...] = (jnp.dot(x_fc, fcw_ref[...], preferred_element_type=f32)
                        + fcb_ref[...])

        hT_ref[0] = h0_final
        hT_ref[1] = h1_final

    return kernel


# ----------------------------- wrappers --------------------------------------
def vae_decode_pallas(prep, z, hidden):
    """Fused Pallas implementation of VAE_decode.forward(z, hidden)."""
    S, B, D = z.shape
    L, _, H = hidden.shape
    if L != 2:
        raise NotImplementedError("fused wavefront kernel is specialized for gru_stack_size == 2")
    A = prep["fc_w_t"].shape[-1]

    z2d = z.reshape(S * B, D)                  # free metadata reshapes
    h2d = hidden.reshape(L * B, H)             # [h0; h1] row-stacked

    dec2d, hT = pl.pallas_call(
        make_vae_decode_kernel(S, B, D, H),
        out_shape=(jax.ShapeDtypeStruct((S * B, A), jnp.float32),
                   jax.ShapeDtypeStruct((L, B, H), jnp.float32)),
    )(z2d, h2d, prep["w_big"], prep["bias_pair"], prep["fc_w_t"], prep["fc_b"])

    return dec2d.reshape(S, B, A), hT


vae_decode_forward = jax.jit(vae_decode_pallas)


def init_params(key):
    """Deterministic init matching PyTorch shapes (GRU + Linear), U(-k, k)."""
    params = {"gru": []}
    H = GRU_NEURONS
    k_gru = 1.0 / np.sqrt(H)
    for layer in range(GRU_STACK_SIZE):
        in_dim = LATENT_DIM if layer == 0 else H
        key, k1, k2, k3, k4 = jax.random.split(key, 5)
        # PyTorch: weight_ih_l{l} (3H, in_dim), weight_hh_l{l} (3H, H), biases (3H,)
        w_ih = jax.random.uniform(k1, (3 * H, in_dim), jnp.float32, -k_gru, k_gru)
        w_hh = jax.random.uniform(k2, (3 * H, H), jnp.float32, -k_gru, k_gru)
        b_ih = jax.random.uniform(k3, (3 * H,), jnp.float32, -k_gru, k_gru)
        b_hh = jax.random.uniform(k4, (3 * H,), jnp.float32, -k_gru, k_gru)
        params["gru"].append(dict(w_ih=w_ih, w_hh=w_hh, b_ih=b_ih, b_hh=b_hh))
    key, k5, k6 = jax.random.split(key, 3)
    k_fc = 1.0 / np.sqrt(H)
    params["fc_w"] = jax.random.uniform(k5, (LEN_ALPHABET, H), jnp.float32, -k_fc, k_fc)
    params["fc_b"] = jax.random.uniform(k6, (LEN_ALPHABET,), jnp.float32, -k_fc, k_fc)
    return params


def prepare_params(params):
    """One-time host-side packing: all transposes, gate fusion and layer stacking
    happen here, so the kernel receives only 4 parameter refs (plus z, hidden)."""
    H = GRU_NEURONS
    p0, p1 = params["gru"]                     # kernel is specialized for 2 layers
    D = p0["w_ih"].shape[1]

    w_hh0_t = jnp.transpose(p0["w_hh"])        # (H, 3H), gate order [r, z, n]
    w_hh1_t = jnp.transpose(p1["w_hh"])        # (H, 3H)
    w_ih1_t = jnp.transpose(p1["w_ih"])        # (H, 3H)  (layer-1 input dim == H)
    w_ih0_t = jnp.transpose(p0["w_ih"])        # (D, 3H)
    zH = jnp.zeros((H, 3 * H), jnp.float32)
    zD = jnp.zeros((D, 3 * H), jnp.float32)

    # Fused RHS for the per-diagonal wavefront matmul (contraction dim = 3H + D):
    #   rows 0:H      -> [ W_hh_l0 |    0    ]   multiplied by h0      (layer-0 rows)
    #   rows H:2H     -> [ W_hh_l1 |    0    ]   multiplied by h1      (layer-1 rows)
    #   rows 2H:3H    -> [    0    | W_ih_l1 ]   multiplied by x1(=h0) (layer-1 rows)
    #   rows 3H:3H+D  -> [    0    | W_ih_l0 ]   multiplied by z_t     (layer-0 rows)
    w_big = jnp.concatenate([
        jnp.concatenate([w_hh0_t, zH], axis=1),
        jnp.concatenate([w_hh1_t, zH], axis=1),
        jnp.concatenate([zH, w_ih1_t], axis=1),
        jnp.concatenate([zD, w_ih0_t], axis=1)], axis=0)      # (3H+D, 6H)

    bias_pair = jnp.stack([
        jnp.concatenate([p0["b_hh"], p0["b_ih"]]),            # layer-0 row: [b_hh | b_ih]
        jnp.concatenate([p1["b_hh"], p1["b_ih"]])], axis=0)   # (2, 6H)

    return dict(w_big=w_big, bias_pair=bias_pair,
                fc_w_t=jnp.transpose(params["fc_w"]),         # (H, A)
                fc_b=params["fc_b"][None, :])                 # (1, A)


# --------------------------- pure-JAX reference ------------------------------
def gru_reference(params, z, hidden):
    x = z
    h_finals = []
    for layer, p in enumerate(params["gru"]):
        h = hidden[layer]
        H = h.shape[-1]
        ys = []
        for t in range(x.shape[0]):
            gi = x[t] @ p["w_ih"].T + p["b_ih"]
            gh = h @ p["w_hh"].T + p["b_hh"]
            r = jax.nn.sigmoid(gi[:, :H] + gh[:, :H])
            zg = jax.nn.sigmoid(gi[:, H:2 * H] + gh[:, H:2 * H])
            n = jnp.tanh(gi[:, 2 * H:] + r * gh[:, 2 * H:])
            h = (1.0 - zg) * n + zg * h
            ys.append(h)
        x = jnp.stack(ys, axis=0)
        h_finals.append(h)
    dec = x @ params["fc_w"].T + params["fc_b"]
    return dec, jnp.stack(h_finals, axis=0)


# ----------------------------------- main ------------------------------------
if __name__ == "__main__":
    key = jax.random.PRNGKey(0)
    kp, kz = jax.random.split(key)
    params = init_params(kp)
    prep = prepare_params(params)             # one-time weight packing (outside jit)

    z = jax.random.normal(kz, (SEQ_LEN, BATCH, LATENT_DIM), jnp.float32)
    hidden0 = jnp.zeros((GRU_STACK_SIZE, BATCH, GRU_NEURONS), jnp.float32)

    decoded, hidden_out = vae_decode_forward(prep, z, hidden0)
    jax.block_until_ready((decoded, hidden_out))

    dec_ref, hid_ref = gru_reference(params, z, hidden0)
    np.testing.assert_allclose(np.asarray(decoded), np.asarray(dec_ref),
                               rtol=1e-5, atol=1e-5)
    np.testing.assert_allclose(np.asarray(hidden_out), np.asarray(hid_ref),
                               rtol=1e-5, atol=1e-5)

    assert decoded.shape == (SEQ_LEN, BATCH, LEN_ALPHABET)
    assert hidden_out.shape == (GRU_STACK_SIZE, BATCH, GRU_NEURONS)
    print("KERNEL_OK")
</pallas_src>

<mosaic_0001>
module attributes {stable_mosaic.version = 11 : i64} {
  func.func @kernel(%arg0: memref<16x32xf32, #tpu.memory_space<vmem>>, %arg1: memref<4x32xf32, #tpu.memory_space<vmem>>, %arg2: memref<128x192xf32, #tpu.memory_space<vmem>>, %arg3: memref<2x192xf32, #tpu.memory_space<vmem>>, %arg4: memref<32x24xf32, #tpu.memory_space<vmem>>, %arg5: memref<1x24xf32, #tpu.memory_space<vmem>>, %arg6: memref<16x24xf32, #tpu.memory_space<vmem>>, %arg7: memref<2x2x32xf32, #tpu.memory_space<vmem>>) attributes {dimension_semantics = [], scalar_prefetch = 0 : i64, scratch_operands = 0 : i64, tpu.core_type = #tpu.core_type<tc>} {
    %c0 = arith.constant 0 : index
    %c0_0 = arith.constant 0 : index
    %0 = vector.load %arg0[%c0, %c0_0] : memref<16x32xf32, #tpu.memory_space<vmem>>, vector<16x32xf32>
    %1 = vector.extract_strided_slice %0 {offsets = [0, 0], sizes = [2, 32], strides = [1, 1]} : vector<16x32xf32> to vector<2x32xf32>
    %2 = vector.extract_strided_slice %0 {offsets = [2, 0], sizes = [2, 32], strides = [1, 1]} : vector<16x32xf32> to vector<2x32xf32>
    %3 = vector.extract_strided_slice %0 {offsets = [4, 0], sizes = [2, 32], strides = [1, 1]} : vector<16x32xf32> to vector<2x32xf32>
    %4 = vector.extract_strided_slice %0 {offsets = [6, 0], sizes = [2, 32], strides = [1, 1]} : vector<16x32xf32> to vector<2x32xf32>
    %5 = vector.extract_strided_slice %0 {offsets = [8, 0], sizes = [2, 32], strides = [1, 1]} : vector<16x32xf32> to vector<2x32xf32>
    %6 = vector.extract_strided_slice %0 {offsets = [10, 0], sizes = [2, 32], strides = [1, 1]} : vector<16x32xf32> to vector<2x32xf32>
    %7 = vector.extract_strided_slice %0 {offsets = [12, 0], sizes = [2, 32], strides = [1, 1]} : vector<16x32xf32> to vector<2x32xf32>
    %8 = vector.extract_strided_slice %0 {offsets = [14, 0], sizes = [2, 32], strides = [1, 1]} : vector<16x32xf32> to vector<2x32xf32>
    %c0_1 = arith.constant 0 : index
    %c0_2 = arith.constant 0 : index
    %9 = vector.load %arg2[%c0_1, %c0_2] : memref<128x192xf32, #tpu.memory_space<vmem>>, vector<128x192xf32>
    %c0_3 = arith.constant 0 : index
    %c0_4 = arith.constant 0 : index
    %10 = vector.load %arg3[%c0_3, %c0_4] : memref<2x192xf32, #tpu.memory_space<vmem>>, vector<1x192xf32>
    %11 = vector.shape_cast %10 : vector<1x192xf32> to vector<1x192xf32>
    %12 = vector.broadcast %11 : vector<1x192xf32> to vector<2x192xf32>
    %c1 = arith.constant 1 : index
    %c0_5 = arith.constant 0 : index
    %13 = vector.load %arg3[%c1, %c0_5] : memref<2x192xf32, #tpu.memory_space<vmem>>, vector<1x192xf32>
    %14 = vector.shape_cast %13 : vector<1x192xf32> to vector<1x192xf32>
    %15 = vector.broadcast %14 : vector<1x192xf32> to vector<2x192xf32>
    %16 = tpu.concatenate %12, %15 in 0 : vector<2x192xf32>, vector<2x192xf32> -> vector<4x192xf32>
    %cst = arith.constant 0.000000e+00 : f32
    %17 = vector.broadcast %cst : f32 to vector<2x32xf32>
    %cst_6 = arith.constant 0.000000e+00 : f32
    %18 = vector.broadcast %cst_6 : f32 to vector<2x64xf32>
    %cst_7 = arith.constant 0.000000e+00 : f32
    %19 = vector.broadcast %cst_7 : f32 to vector<2x32xf32>
    %c0_8 = arith.constant 0 : index
    %c0_9 = arith.constant 0 : index
    %20 = vector.load %arg1[%c0_8, %c0_9] : memref<4x32xf32, #tpu.memory_space<vmem>>, vector<4x32xf32>
    %21 = vector.extract_strided_slice %20 {offsets = [0, 0], sizes = [2, 32], strides = [1, 1]} : vector<4x32xf32> to vector<2x32xf32>
    %22 = vector.extract_strided_slice %20 {offsets = [2, 0], sizes = [2, 32], strides = [1, 1]} : vector<4x32xf32> to vector<2x32xf32>
    %23 = tpu.concatenate %21, %18, %1 in 1 : vector<2x32xf32>, vector<2x64xf32>, vector<2x32xf32> -> vector<2x128xf32>
    %24 = tpu.concatenate %17, %22, %21, %19 in 1 : vector<2x32xf32>, vector<2x32xf32>, vector<2x32xf32>, vector<2x32xf32> -> vector<2x128xf32>
    %25 = tpu.concatenate %23, %24 in 0 : vector<2x128xf32>, vector<2x128xf32> -> vector<4x128xf32>
    %cst_10 = arith.constant dense<0.000000e+00> : vector<4x192xf32>
    %26 = tpu.matmul %25, %9, %cst_10 {dimension_numbers = #tpu.dot_dimension_numbers<[1], [0], [0], [1], [0, 0, 1, 1], [], []>} : vector<4x128xf32>, vector<128x192xf32>, vector<4x192xf32> -> vector<4x192xf32>
    %27 = arith.addf %26, %16 : vector<4x192xf32>
    %28 = vector.extract_strided_slice %27 {offsets = [0, 0], sizes = [4, 96], strides = [1, 1]} : vector<4x192xf32> to vector<4x96xf32>
    %29 = vector.extract_strided_slice %27 {offsets = [0, 96], sizes = [4, 96], strides = [1, 1]} : vector<4x192xf32> to vector<4x96xf32>
    %30 = vector.extract_strided_slice %29 {offsets = [0, 0], sizes = [4, 64], strides = [1, 1]} : vector<4x96xf32> to vector<4x64xf32>
    %31 = vector.extract_strided_slice %28 {offsets = [0, 0], sizes = [4, 64], strides = [1, 1]} : vector<4x96xf32> to vector<4x64xf32>
    %32 = arith.addf %30, %31 : vector<4x64xf32>
    %33 = arith.negf %32 : vector<4x64xf32>
    %34 = math.exp %33 : vector<4x64xf32>
    %cst_11 = arith.constant 1.000000e+00 : f32
    %35 = vector.broadcast %cst_11 : f32 to vector<4x64xf32>
    %36 = arith.addf %35, %34 : vector<4x64xf32>
    %37 = arith.divf %35, %36 : vector<4x64xf32>
    %38 = vector.extract_strided_slice %37 {offsets = [0, 0], sizes = [4, 32], strides = [1, 1]} : vector<4x64xf32> to vector<4x32xf32>
    %39 = vector.extract_strided_slice %37 {offsets = [0, 32], sizes = [4, 32], strides = [1, 1]} : vector<4x64xf32> to vector<4x32xf32>
    %40 = vector.extract_strided_slice %29 {offsets = [0, 64], sizes = [4, 32], strides = [1, 1]} : vector<4x96xf32> to vector<4x32xf32>
    %41 = vector.extract_strided_slice %28 {offsets = [0, 64], sizes = [4, 32], strides = [1, 1]} : vector<4x96xf32> to vector<4x32xf32>
    %42 = arith.mulf %38, %41 : vector<4x32xf32>
    %43 = arith.addf %40, %42 : vector<4x32xf32>
    %44 = math.tanh %43 : vector<4x32xf32>
    %cst_12 = arith.constant 1.000000e+00 : f32
    %45 = vector.broadcast %cst_12 : f32 to vector<4x32xf32>
    %46 = arith.subf %45, %39 : vector<4x32xf32>
    %47 = arith.mulf %46, %44 : vector<4x32xf32>
    %48 = arith.mulf %39, %20 : vector<4x32xf32>
    %49 = arith.addf %47, %48 : vector<4x32xf32>
    %50 = vector.extract_strided_slice %49 {offsets = [0, 0], sizes = [2, 32], strides = [1, 1]} : vector<4x32xf32> to vector<2x32xf32>
    %51 = vector.extract_strided_slice %20 {offsets = [2, 0], sizes = [2, 32], strides = [1, 1]} : vector<4x32xf32> to vector<2x32xf32>
    %52 = tpu.concatenate %50, %51 in 0 : vector<2x32xf32>, vector<2x32xf32> -> vector<4x32xf32>
    %53 = vector.extract_strided_slice %52 {offsets = [0, 0], sizes = [2, 32], strides = [1, 1]} : vector<4x32xf32> to vector<2x32xf32>
    %54 = vector.extract_strided_slice %52 {offsets = [2, 0], sizes = [2, 32], strides = [1, 1]} : vector<4x32xf32> to vector<2x32xf32>
    %55 = tpu.concatenate %53, %18, %2 in 1 : vector<2x32xf32>, vector<2x64xf32>, vector<2x32xf32> -> vector<2x128xf32>
    %56 = tpu.concatenate %17, %54, %53, %19 in 1 : vector<2x32xf32>, vector<2x32xf32>, vector<2x32xf32>, vector<2x32xf32> -> vector<2x128xf32>
    %57 = tpu.concatenate %55, %56 in 0 : vector<2x128xf32>, vector<2x128xf32> -> vector<4x128xf32>
    %cst_13 = arith.constant dense<0.000000e+00> : vector<4x192xf32>
    %58 = tpu.matmul %57, %9, %cst_13 {dimension_numbers = #tpu.dot_dimension_numbers<[1], [0], [0], [1], [0, 0, 1, 1], [], []>} : vector<4x128xf32>, vector<128x192xf32>, vector<4x192xf32> -> vector<4x192xf32>
    %59 = arith.addf %58, %16 : vector<4x192xf32>
    %60 = vector.extract_strided_slice %59 {offsets = [0, 0], sizes = [4, 96], strides = [1, 1]} : vector<4x192xf32> to vector<4x96xf32>
    %61 = vector.extract_strided_slice %59 {offsets = [0, 96], sizes = [4, 96], strides = [1, 1]} : vector<4x192xf32> to vector<4x96xf32>
    %62 = vector.extract_strided_slice %61 {offsets = [0, 0], sizes = [4, 64], strides = [1, 1]} : vector<4x96xf32> to vector<4x64xf32>
    %63 = vector.extract_strided_slice %60 {offsets = [0, 0], sizes = [4, 64], strides = [1, 1]} : vector<4x96xf32> to vector<4x64xf32>
    %64 = arith.addf %62, %63 : vector<4x64xf32>
    %65 = arith.negf %64 : vector<4x64xf32>
    %66 = math.exp %65 : vector<4x64xf32>
    %cst_14 = arith.constant 1.000000e+00 : f32
    %67 = vector.broadcast %cst_14 : f32 to vector<4x64xf32>
    %68 = arith.addf %67, %66 : vector<4x64xf32>
    %69 = arith.divf %67, %68 : vector<4x64xf32>
    %70 = vector.extract_strided_slice %69 {offsets = [0, 0], sizes = [4, 32], strides = [1, 1]} : vector<4x64xf32> to vector<4x32xf32>
    %71 = vector.extract_strided_slice %69 {offsets = [0, 32], sizes = [4, 32], strides = [1, 1]} : vector<4x64xf32> to vector<4x32xf32>
    %72 = vector.extract_strided_slice %61 {offsets = [0, 64], sizes = [4, 32], strides = [1, 1]} : vector<4x96xf32> to vector<4x32xf32>
    %73 = vector.extract_strided_slice %60 {offsets = [0, 64], sizes = [4, 32], strides = [1, 1]} : vector<4x96xf32> to vector<4x32xf32>
    %74 = arith.mulf %70, %73 : vector<4x32xf32>
    %75 = arith.addf %72, %74 : vector<4x32xf32>
    %76 = math.tanh %75 : vector<4x32xf32>
    %cst_15 = arith.constant 1.000000e+00 : f32
    %77 = vector.broadcast %cst_15 : f32 to vector<4x32xf32>
    %78 = arith.subf %77, %71 : vector<4x32xf32>
    %79 = arith.mulf %78, %76 : vector<4x32xf32>
    %80 = arith.mulf %71, %52 : vector<4x32xf32>
    %81 = arith.addf %79, %80 : vector<4x32xf32>
    %82 = vector.extract_strided_slice %81 {offsets = [2, 0], sizes = [2, 32], strides = [1, 1]} : vector<4x32xf32> to vector<2x32xf32>
    %83 = vector.extract_strided_slice %81 {offsets = [0, 0], sizes = [2, 32], strides = [1, 1]} : vector<4x32xf32> to vector<2x32xf32>
    %84 = vector.extract_strided_slice %81 {offsets = [2, 0], sizes = [2, 32], strides = [1, 1]} : vector<4x32xf32> to vector<2x32xf32>
    %85 = tpu.concatenate %83, %18, %3 in 1 : vector<2x32xf32>, vector<2x64xf32>, vector<2x32xf32> -> vector<2x128xf32>
    %86 = tpu.concatenate %17, %84, %83, %19 in 1 : vector<2x32xf32>, vector<2x32xf32>, vector<2x32xf32>, vector<2x32xf32> -> vector<2x128xf32>
    %87 = tpu.concatenate %85, %86 in 0 : vector<2x128xf32>, vector<2x128xf32> -> vector<4x128xf32>
    %cst_16 = arith.constant dense<0.000000e+00> : vector<4x192xf32>
    %88 = tpu.matmul %87, %9, %cst_16 {dimension_numbers = #tpu.dot_dimension_numbers<[1], [0], [0], [1], [0, 0, 1, 1], [], []>} : vector<4x128xf32>, vector<128x192xf32>, vector<4x192xf32> -> vector<4x192xf32>
    %89 = arith.addf %88, %16 : vector<4x192xf32>
    %90 = vector.extract_strided_slice %89 {offsets = [0, 0], sizes = [4, 96], strides = [1, 1]} : vector<4x192xf32> to vector<4x96xf32>
    %91 = vector.extract_strided_slice %89 {offsets = [0, 96], sizes = [4, 96], strides = [1, 1]} : vector<4x192xf32> to vector<4x96xf32>
    %92 = vector.extract_strided_slice %91 {offsets = [0, 0], sizes = [4, 64], strides = [1, 1]} : vector<4x96xf32> to vector<4x64xf32>
    %93 = vector.extract_strided_slice %90 {offsets = [0, 0], sizes = [4, 64], strides = [1, 1]} : vector<4x96xf32> to vector<4x64xf32>
    %94 = arith.addf %92, %93 : vector<4x64xf32>
    %95 = arith.negf %94 : vector<4x64xf32>
    %96 = math.exp %95 : vector<4x64xf32>
    %cst_17 = arith.constant 1.000000e+00 : f32
    %97 = vector.broadcast %cst_17 : f32 to vector<4x64xf32>
    %98 = arith.addf %97, %96 : vector<4x64xf32>
    %99 = arith.divf %97, %98 : vector<4x64xf32>
    %100 = vector.extract_strided_slice %99 {offsets = [0, 0], sizes = [4, 32], strides = [1, 1]} : vector<4x64xf32> to vector<4x32xf32>
    %101 = vector.extract_strided_slice %99 {offsets = [0, 32], sizes = [4, 32], strides = [1, 1]} : vector<4x64xf32> to vector<4x32xf32>
    %102 = vector.extract_strided_slice %91 {offsets = [0, 64], sizes = [4, 32], strides = [1, 1]} : vector<4x96xf32> to vector<4x32xf32>
    %103 = vector.extract_strided_slice %90 {offsets = [0, 64], sizes = [4, 32], strides = [1, 1]} : vector<4x96xf32> to vector<4x32xf32>
    %104 = arith.mulf %100, %103 : vector<4x32xf32>
    %105 = arith.addf %102, %104 : vector<4x32xf32>
    %106 = math.tanh %105 : vector<4x32xf32>
    %cst_18 = arith.constant 1.000000e+00 : f32
    %107 = vector.broadcast %cst_18 : f32 to vector<4x32xf32>
    %108 = arith.subf %107, %101 : vector<4x32xf32>
    %109 = arith.mulf %108, %106 : vector<4x32xf32>
    %110 = arith.mulf %101, %81 : vector<4x32xf32>
    %111 = arith.addf %109, %110 : vector<4x32xf32>
    %112 = vector.extract_strided_slice %111 {offsets = [2, 0], sizes = [2, 32], strides = [1, 1]} : vector<4x32xf32> to vector<2x32xf32>
    %113 = vector.extract_strided_slice %111 {offsets = [0, 0], sizes = [2, 32], strides = [1, 1]} : vector<4x32xf32> to vector<2x32xf32>
    %114 = vector.extract_strided_slice %111 {offsets = [2, 0], sizes = [2, 32], strides = [1, 1]} : vector<4x32xf32> to vector<2x32xf32>
    %115 = tpu.concatenate %113, %18, %4 in 1 : vector<2x32xf32>, vector<2x64xf32>, vector<2x32xf32> -> vector<2x128xf32>
    %116 = tpu.concatenate %17, %114, %113, %19 in 1 : vector<2x32xf32>, vector<2x32xf32>, vector<2x32xf32>, vector<2x32xf32> -> vector<2x128xf32>
    %117 = tpu.concatenate %115, %116 in 0 : vector<2x128xf32>, vector<2x128xf32> -> vector<4x128xf32>
    %cst_19 = arith.constant dense<0.000000e+00> : vector<4x192xf32>
    %118 = tpu.matmul %117, %9, %cst_19 {dimension_numbers = #tpu.dot_dimension_numbers<[1], [0], [0], [1], [0, 0, 1, 1], [], []>} : vector<4x128xf32>, vector<128x192xf32>, vector<4x192xf32> -> vector<4x192xf32>
    %119 = arith.addf %118, %16 : vector<4x192xf32>
    %120 = vector.extract_strided_slice %119 {offsets = [0, 0], sizes = [4, 96], strides = [1, 1]} : vector<4x192xf32> to vector<4x96xf32>
    %121 = vector.extract_strided_slice %119 {offsets = [0, 96], sizes = [4, 96], strides = [1, 1]} : vector<4x192xf32> to vector<4x96xf32>
    %122 = vector.extract_strided_slice %121 {offsets = [0, 0], sizes = [4, 64], strides = [1, 1]} : vector<4x96xf32> to vector<4x64xf32>
    %123 = vector.extract_strided_slice %120 {offsets = [0, 0], sizes = [4, 64], strides = [1, 1]} : vector<4x96xf32> to vector<4x64xf32>
    %124 = arith.addf %122, %123 : vector<4x64xf32>
    %125 = arith.negf %124 : vector<4x64xf32>
    %126 = math.exp %125 : vector<4x64xf32>
    %cst_20 = arith.constant 1.000000e+00 : f32
    %127 = vector.broadcast %cst_20 : f32 to vector<4x64xf32>
    %128 = arith.addf %127, %126 : vector<4x64xf32>
    %129 = arith.divf %127, %128 : vector<4x64xf32>
    %130 = vector.extract_strided_slice %129 {offsets = [0, 0], sizes = [4, 32], strides = [1, 1]} : vector<4x64xf32> to vector<4x32xf32>
    %131 = vector.extract_strided_slice %129 {offsets = [0, 32], sizes = [4, 32], strides = [1, 1]} : vector<4x64xf32> to vector<4x32xf32>
    %132 = vector.extract_strided_slice %121 {offsets = [0, 64], sizes = [4, 32], strides = [1, 1]} : vector<4x96xf32> to vector<4x32xf32>
    %133 = vector.extract_strided_slice %120 {offsets = [0, 64], sizes = [4, 32], strides = [1, 1]} : vector<4x96xf32> to vector<4x32xf32>
    %134 = arith.mulf %130, %133 : vector<4x32xf32>
    %135 = arith.addf %132, %134 : vector<4x32xf32>
    %136 = math.tanh %135 : vector<4x32xf32>
    %cst_21 = arith.constant 1.000000e+00 : f32
    %137 = vector.broadcast %cst_21 : f32 to vector<4x32xf32>
    %138 = arith.subf %137, %131 : vector<4x32xf32>
    %139 = arith.mulf %138, %136 : vector<4x32xf32>
    %140 = arith.mulf %131, %111 : vector<4x32xf32>
    %141 = arith.addf %139, %140 : vector<4x32xf32>
    %142 = vector.extract_strided_slice %141 {offsets = [2, 0], sizes = [2, 32], strides = [1, 1]} : vector<4x32xf32> to vector<2x32xf32>
    %143 = vector.extract_strided_slice %141 {offsets = [0, 0], sizes = [2, 32], strides = [1, 1]} : vector<4x32xf32> to vector<2x32xf32>
    %144 = vector.extract_strided_slice %141 {offsets = [2, 0], sizes = [2, 32], strides = [1, 1]} : vector<4x32xf32> to vector<2x32xf32>
    %145 = tpu.concatenate %143, %18, %5 in 1 : vector<2x32xf32>, vector<2x64xf32>, vector<2x32xf32> -> vector<2x128xf32>
    %146 = tpu.concatenate %17, %144, %143, %19 in 1 : vector<2x32xf32>, vector<2x32xf32>, vector<2x32xf32>, vector<2x32xf32> -> vector<2x128xf32>
    %147 = tpu.concatenate %145, %146 in 0 : vector<2x128xf32>, vector<2x128xf32> -> vector<4x128xf32>
    %cst_22 = arith.constant dense<0.000000e+00> : vector<4x192xf32>
    %148 = tpu.matmul %147, %9, %cst_22 {dimension_numbers = #tpu.dot_dimension_numbers<[1], [0], [0], [1], [0, 0, 1, 1], [], []>} : vector<4x128xf32>, vector<128x192xf32>, vector<4x192xf32> -> vector<4x192xf32>
    %149 = arith.addf %148, %16 : vector<4x192xf32>
    %150 = vector.extract_strided_slice %149 {offsets = [0, 0], sizes = [4, 96], strides = [1, 1]} : vector<4x192xf32> to vector<4x96xf32>
    %151 = vector.extract_strided_slice %149 {offsets = [0, 96], sizes = [4, 96], strides = [1, 1]} : vector<4x192xf32> to vector<4x96xf32>
    %152 = vector.extract_strided_slice %151 {offsets = [0, 0], sizes = [4, 64], strides = [1, 1]} : vector<4x96xf32> to vector<4x64xf32>
    %153 = vector.extract_strided_slice %150 {offsets = [0, 0], sizes = [4, 64], strides = [1, 1]} : vector<4x96xf32> to vector<4x64xf32>
    %154 = arith.addf %152, %153 : vector<4x64xf32>
    %155 = arith.negf %154 : vector<4x64xf32>
    %156 = math.exp %155 : vector<4x64xf32>
    %cst_23 = arith.constant 1.000000e+00 : f32
    %157 = vector.broadcast %cst_23 : f32 to vector<4x64xf32>
    %158 = arith.addf %157, %156 : vector<4x64xf32>
    %159 = arith.divf %157, %158 : vector<4x64xf32>
    %160 = vector.extract_strided_slice %159 {offsets = [0, 0], sizes = [4, 32], strides = [1, 1]} : vector<4x64xf32> to vector<4x32xf32>
    %161 = vector.extract_strided_slice %159 {offsets = [0, 32], sizes = [4, 32], strides = [1, 1]} : vector<4x64xf32> to vector<4x32xf32>
    %162 = vector.extract_strided_slice %151 {offsets = [0, 64], sizes = [4, 32], strides = [1, 1]} : vector<4x96xf32> to vector<4x32xf32>
    %163 = vector.extract_strided_slice %150 {offsets = [0, 64], sizes = [4, 32], strides = [1, 1]} : vector<4x96xf32> to vector<4x32xf32>
    %164 = arith.mulf %160, %163 : vector<4x32xf32>
    %165 = arith.addf %162, %164 : vector<4x32xf32>
    %166 = math.tanh %165 : vector<4x32xf32>
    %cst_24 = arith.constant 1.000000e+00 : f32
    %167 = vector.broadcast %cst_24 : f32 to vector<4x32xf32>
    %168 = arith.subf %167, %161 : vector<4x32xf32>
    %169 = arith.mulf %168, %166 : vector<4x32xf32>
    %170 = arith.mulf %161, %141 : vector<4x32xf32>
    %171 = arith.addf %169, %170 : vector<4x32xf32>
    %172 = vector.extract_strided_slice %171 {offsets = [2, 0], sizes = [2, 32], strides = [1, 1]} : vector<4x32xf32> to vector<2x32xf32>
    %173 = vector.extract_strided_slice %171 {offsets = [0, 0], sizes = [2, 32], strides = [1, 1]} : vector<4x32xf32> to vector<2x32xf32>
    %174 = vector.extract_strided_slice %171 {offsets = [2, 0], sizes = [2, 32], strides = [1, 1]} : vector<4x32xf32> to vector<2x32xf32>
    %175 = tpu.concatenate %173, %18, %6 in 1 : vector<2x32xf32>, vector<2x64xf32>, vector<2x32xf32> -> vector<2x128xf32>
    %176 = tpu.concatenate %17, %174, %173, %19 in 1 : vector<2x32xf32>, vector<2x32xf32>, vector<2x32xf32>, vector<2x32xf32> -> vector<2x128xf32>
    %177 = tpu.concatenate %175, %176 in 0 : vector<2x128xf32>, vector<2x128xf32> -> vector<4x128xf32>
    %cst_25 = arith.constant dense<0.000000e+00> : vector<4x192xf32>
    %178 = tpu.matmul %177, %9, %cst_25 {dimension_numbers = #tpu.dot_dimension_numbers<[1], [0], [0], [1], [0, 0, 1, 1], [], []>} : vector<4x128xf32>, vector<128x192xf32>, vector<4x192xf32> -> vector<4x192xf32>
    %179 = arith.addf %178, %16 : vector<4x192xf32>
    %180 = vector.extract_strided_slice %179 {offsets = [0, 0], sizes = [4, 96], strides = [1, 1]} : vector<4x192xf32> to vector<4x96xf32>
    %181 = vector.extract_strided_slice %179 {offsets = [0, 96], sizes = [4, 96], strides = [1, 1]} : vector<4x192xf32> to vector<4x96xf32>
    %182 = vector.extract_strided_slice %181 {offsets = [0, 0], sizes = [4, 64], strides = [1, 1]} : vector<4x96xf32> to vector<4x64xf32>
    %183 = vector.extract_strided_slice %180 {offsets = [0, 0], sizes = [4, 64], strides = [1, 1]} : vector<4x96xf32> to vector<4x64xf32>
    %184 = arith.addf %182, %183 : vector<4x64xf32>
    %185 = arith.negf %184 : vector<4x64xf32>
    %186 = math.exp %185 : vector<4x64xf32>
    %cst_26 = arith.constant 1.000000e+00 : f32
    %187 = vector.broadcast %cst_26 : f32 to vector<4x64xf32>
    %188 = arith.addf %187, %186 : vector<4x64xf32>
    %189 = arith.divf %187, %188 : vector<4x64xf32>
    %190 = vector.extract_strided_slice %189 {offsets = [0, 0], sizes = [4, 32], strides = [1, 1]} : vector<4x64xf32> to vector<4x32xf32>
    %191 = vector.extract_strided_slice %189 {offsets = [0, 32], sizes = [4, 32], strides = [1, 1]} : vector<4x64xf32> to vector<4x32xf32>
    %192 = vector.extract_strided_slice %181 {offsets = [0, 64], sizes = [4, 32], strides = [1, 1]} : vector<4x96xf32> to vector<4x32xf32>
    %193 = vector.extract_strided_slice %180 {offsets = [0, 64], sizes = [4, 32], strides = [1, 1]} : vector<4x96xf32> to vector<4x32xf32>
    %194 = arith.mulf %190, %193 : vector<4x32xf32>
    %195 = arith.addf %192, %194 : vector<4x32xf32>
    %196 = math.tanh %195 : vector<4x32xf32>
    %cst_27 = arith.constant 1.000000e+00 : f32
    %197 = vector.broadcast %cst_27 : f32 to vector<4x32xf32>
    %198 = arith.subf %197, %191 : vector<4x32xf32>
    %199 = arith.mulf %198, %196 : vector<4x32xf32>
    %200 = arith.mulf %191, %171 : vector<4x32xf32>
    %201 = arith.addf %199, %200 : vector<4x32xf32>
    %202 = vector.extract_strided_slice %201 {offsets = [2, 0], sizes = [2, 32], strides = [1, 1]} : vector<4x32xf32> to vector<2x32xf32>
    %203 = vector.extract_strided_slice %201 {offsets = [0, 0], sizes = [2, 32], strides = [1, 1]} : vector<4x32xf32> to vector<2x32xf32>
    %204 = vector.extract_strided_slice %201 {offsets = [2, 0], sizes = [2, 32], strides = [1, 1]} : vector<4x32xf32> to vector<2x32xf32>
    %205 = tpu.concatenate %203, %18, %7 in 1 : vector<2x32xf32>, vector<2x64xf32>, vector<2x32xf32> -> vector<2x128xf32>
    %206 = tpu.concatenate %17, %204, %203, %19 in 1 : vector<2x32xf32>, vector<2x32xf32>, vector<2x32xf32>, vector<2x32xf32> -> vector<2x128xf32>
    %207 = tpu.concatenate %205, %206 in 0 : vector<2x128xf32>, vector<2x128xf32> -> vector<4x128xf32>
    %cst_28 = arith.constant dense<0.000000e+00> : vector<4x192xf32>
    %208 = tpu.matmul %207, %9, %cst_28 {dimension_numbers = #tpu.dot_dimension_numbers<[1], [0], [0], [1], [0, 0, 1, 1], [], []>} : vector<4x128xf32>, vector<128x192xf32>, vector<4x192xf32> -> vector<4x192xf32>
    %209 = arith.addf %208, %16 : vector<4x192xf32>
    %210 = vector.extract_strided_slice %209 {offsets = [0, 0], sizes = [4, 96], strides = [1, 1]} : vector<4x192xf32> to vector<4x96xf32>
    %211 = vector.extract_strided_slice %209 {offsets = [0, 96], sizes = [4, 96], strides = [1, 1]} : vector<4x192xf32> to vector<4x96xf32>
    %212 = vector.extract_strided_slice %211 {offsets = [0, 0], sizes = [4, 64], strides = [1, 1]} : vector<4x96xf32> to vector<4x64xf32>
    %213 = vector.extract_strided_slice %210 {offsets = [0, 0], sizes = [4, 64], strides = [1, 1]} : vector<4x96xf32> to vector<4x64xf32>
    %214 = arith.addf %212, %213 : vector<4x64xf32>
    %215 = arith.negf %214 : vector<4x64xf32>
    %216 = math.exp %215 : vector<4x64xf32>
    %cst_29 = arith.constant 1.000000e+00 : f32
    %217 = vector.broadcast %cst_29 : f32 to vector<4x64xf32>
    %218 = arith.addf %217, %216 : vector<4x64xf32>
    %219 = arith.divf %217, %218 : vector<4x64xf32>
    %220 = vector.extract_strided_slice %219 {offsets = [0, 0], sizes = [4, 32], strides = [1, 1]} : vector<4x64xf32> to vector<4x32xf32>
    %221 = vector.extract_strided_slice %219 {offsets = [0, 32], sizes = [4, 32], strides = [1, 1]} : vector<4x64xf32> to vector<4x32xf32>
    %222 = vector.extract_strided_slice %211 {offsets = [0, 64], sizes = [4, 32], strides = [1, 1]} : vector<4x96xf32> to vector<4x32xf32>
    %223 = vector.extract_strided_slice %210 {offsets = [0, 64], sizes = [4, 32], strides = [1, 1]} : vector<4x96xf32> to vector<4x32xf32>
    %224 = arith.mulf %220, %223 : vector<4x32xf32>
    %225 = arith.addf %222, %224 : vector<4x32xf32>
    %226 = math.tanh %225 : vector<4x32xf32>
    %cst_30 = arith.constant 1.000000e+00 : f32
    %227 = vector.broadcast %cst_30 : f32 to vector<4x32xf32>
    %228 = arith.subf %227, %221 : vector<4x32xf32>
    %229 = arith.mulf %228, %226 : vector<4x32xf32>
    %230 = arith.mulf %221, %201 : vector<4x32xf32>
    %231 = arith.addf %229, %230 : vector<4x32xf32>
    %232 = vector.extract_strided_slice %231 {offsets = [2, 0], sizes = [2, 32], strides = [1, 1]} : vector<4x32xf32> to vector<2x32xf32>
    %233 = vector.extract_strided_slice %231 {offsets = [0, 0], sizes = [2, 32], strides = [1, 1]} : vector<4x32xf32> to vector<2x32xf32>
    %234 = vector.extract_strided_slice %231 {offsets = [2, 0], sizes = [2, 32], strides = [1, 1]} : vector<4x32xf32> to vector<2x32xf32>
    %235 = tpu.concatenate %233, %18, %8 in 1 : vector<2x32xf32>, vector<2x64xf32>, vector<2x32xf32> -> vector<2x128xf32>
    %236 = tpu.concatenate %17, %234, %233, %19 in 1 : vector<2x32xf32>, vector<2x32xf32>, vector<2x32xf32>, vector<2x32xf32> -> vector<2x128xf32>
    %237 = tpu.concatenate %235, %236 in 0 : vector<2x128xf32>, vector<2x128xf32> -> vector<4x128xf32>
    %cst_31 = arith.constant dense<0.000000e+00> : vector<4x192xf32>
    %238 = tpu.matmul %237, %9, %cst_31 {dimension_numbers = #tpu.dot_dimension_numbers<[1], [0], [0], [1], [0, 0, 1, 1], [], []>} : vector<4x128xf32>, vector<128x192xf32>, vector<4x192xf32> -> vector<4x192xf32>
    %239 = arith.addf %238, %16 : vector<4x192xf32>
    %240 = vector.extract_strided_slice %239 {offsets = [0, 0], sizes = [4, 96], strides = [1, 1]} : vector<4x192xf32> to vector<4x96xf32>
    %241 = vector.extract_strided_slice %239 {offsets = [0, 96], sizes = [4, 96], strides = [1, 1]} : vector<4x192xf32> to vector<4x96xf32>
    %242 = vector.extract_strided_slice %241 {offsets = [0, 0], sizes = [4, 64], strides = [1, 1]} : vector<4x96xf32> to vector<4x64xf32>
    %243 = vector.extract_strided_slice %240 {offsets = [0, 0], sizes = [4, 64], strides = [1, 1]} : vector<4x96xf32> to vector<4x64xf32>
    %244 = arith.addf %242, %243 : vector<4x64xf32>
    %245 = arith.negf %244 : vector<4x64xf32>
    %246 = math.exp %245 : vector<4x64xf32>
    %cst_32 = arith.constant 1.000000e+00 : f32
    %247 = vector.broadcast %cst_32 : f32 to vector<4x64xf32>
    %248 = arith.addf %247, %246 : vector<4x64xf32>
    %249 = arith.divf %247, %248 : vector<4x64xf32>
    %250 = vector.extract_strided_slice %249 {offsets = [0, 0], sizes = [4, 32], strides = [1, 1]} : vector<4x64xf32> to vector<4x32xf32>
    %251 = vector.extract_strided_slice %249 {offsets = [0, 32], sizes = [4, 32], strides = [1, 1]} : vector<4x64xf32> to vector<4x32xf32>
    %252 = vector.extract_strided_slice %241 {offsets = [0, 64], sizes = [4, 32], strides = [1, 1]} : vector<4x96xf32> to vector<4x32xf32>
    %253 = vector.extract_strided_slice %240 {offsets = [0, 64], sizes = [4, 32], strides = [1, 1]} : vector<4x96xf32> to vector<4x32xf32>
    %254 = arith.mulf %250, %253 : vector<4x32xf32>
    %255 = arith.addf %252, %254 : vector<4x32xf32>
    %256 = math.tanh %255 : vector<4x32xf32>
    %cst_33 = arith.constant 1.000000e+00 : f32
    %257 = vector.broadcast %cst_33 : f32 to vector<4x32xf32>
    %258 = arith.subf %257, %251 : vector<4x32xf32>
    %259 = arith.mulf %258, %256 : vector<4x32xf32>
    %260 = arith.mulf %251, %231 : vector<4x32xf32>
    %261 = arith.addf %259, %260 : vector<4x32xf32>
    %262 = vector.extract_strided_slice %261 {offsets = [2, 0], sizes = [2, 32], strides = [1, 1]} : vector<4x32xf32> to vector<2x32xf32>
    %263 = vector.extract_strided_slice %261 {offsets = [0, 0], sizes = [2, 32], strides = [1, 1]} : vector<4x32xf32> to vector<2x32xf32>
    %264 = vector.extract_strided_slice %261 {offsets = [2, 0], sizes = [2, 32], strides = [1, 1]} : vector<4x32xf32> to vector<2x32xf32>
    %265 = tpu.concatenate %263, %18, %8 in 1 : vector<2x32xf32>, vector<2x64xf32>, vector<2x32xf32> -> vector<2x128xf32>
    %266 = tpu.concatenate %17, %264, %263, %19 in 1 : vector<2x32xf32>, vector<2x32xf32>, vector<2x32xf32>, vector<2x32xf32> -> vector<2x128xf32>
    %267 = tpu.concatenate %265, %266 in 0 : vector<2x128xf32>, vector<2x128xf32> -> vector<4x128xf32>
    %cst_34 = arith.constant dense<0.000000e+00> : vector<4x192xf32>
    %268 = tpu.matmul %267, %9, %cst_34 {dimension_numbers = #tpu.dot_dimension_numbers<[1], [0], [0], [1], [0, 0, 1, 1], [], []>} : vector<4x128xf32>, vector<128x192xf32>, vector<4x192xf32> -> vector<4x192xf32>
    %269 = arith.addf %268, %16 : vector<4x192xf32>
    %270 = vector.extract_strided_slice %269 {offsets = [0, 0], sizes = [4, 96], strides = [1, 1]} : vector<4x192xf32> to vector<4x96xf32>
    %271 = vector.extract_strided_slice %269 {offsets = [0, 96], sizes = [4, 96], strides = [1, 1]} : vector<4x192xf32> to vector<4x96xf32>
    %272 = vector.extract_strided_slice %271 {offsets = [0, 0], sizes = [4, 64], strides = [1, 1]} : vector<4x96xf32> to vector<4x64xf32>
    %273 = vector.extract_strided_slice %270 {offsets = [0, 0], sizes = [4, 64], strides = [1, 1]} : vector<4x96xf32> to vector<4x64xf32>
    %274 = arith.addf %272, %273 : vector<4x64xf32>
    %275 = arith.negf %274 : vector<4x64xf32>
    %276 = math.exp %275 : vector<4x64xf32>
    %cst_35 = arith.constant 1.000000e+00 : f32
    %277 = vector.broadcast %cst_35 : f32 to vector<4x64xf32>
    %278 = arith.addf %277, %276 : vector<4x64xf32>
    %279 = arith.divf %277, %278 : vector<4x64xf32>
    %280 = vector.extract_strided_slice %279 {offsets = [0, 0], sizes = [4, 32], strides = [1, 1]} : vector<4x64xf32> to vector<4x32xf32>
    %281 = vector.extract_strided_slice %279 {offsets = [0, 32], sizes = [4, 32], strides = [1, 1]} : vector<4x64xf32> to vector<4x32xf32>
    %282 = vector.extract_strided_slice %271 {offsets = [0, 64], sizes = [4, 32], strides = [1, 1]} : vector<4x96xf32> to vector<4x32xf32>
    %283 = vector.extract_strided_slice %270 {offsets = [0, 64], sizes = [4, 32], strides = [1, 1]} : vector<4x96xf32> to vector<4x32xf32>
    %284 = arith.mulf %280, %283 : vector<4x32xf32>
    %285 = arith.addf %282, %284 : vector<4x32xf32>
    %286 = math.tanh %285 : vector<4x32xf32>
    %cst_36 = arith.constant 1.000000e+00 : f32
    %287 = vector.broadcast %cst_36 : f32 to vector<4x32xf32>
    %288 = arith.subf %287, %281 : vector<4x32xf32>
    %289 = arith.mulf %288, %286 : vector<4x32xf32>
    %290 = arith.mulf %281, %261 : vector<4x32xf32>
    %291 = arith.addf %289, %290 : vector<4x32xf32>
    %292 = vector.extract_strided_slice %291 {offsets = [2, 0], sizes = [2, 32], strides = [1, 1]} : vector<4x32xf32> to vector<2x32xf32>
    %293 = vector.extract_strided_slice %261 {offsets = [0, 0], sizes = [2, 32], strides = [1, 1]} : vector<4x32xf32> to vector<2x32xf32>
    %294 = vector.extract_strided_slice %291 {offsets = [2, 0], sizes = [2, 32], strides = [1, 1]} : vector<4x32xf32> to vector<2x32xf32>
    %295 = tpu.concatenate %82, %112, %142, %172, %202, %232, %262, %292 in 0 : vector<2x32xf32>, vector<2x32xf32>, vector<2x32xf32>, vector<2x32xf32>, vector<2x32xf32>, vector<2x32xf32>, vector<2x32xf32>, vector<2x32xf32> -> vector<16x32xf32>
    %c0_37 = arith.constant 0 : index
    %c0_38 = arith.constant 0 : index
    %296 = vector.load %arg4[%c0_37, %c0_38] : memref<32x24xf32, #tpu.memory_space<vmem>>, vector<32x24xf32>
    %cst_39 = arith.constant dense<0.000000e+00> : vector<16x24xf32>
    %297 = tpu.matmul %295, %296, %cst_39 {dimension_numbers = #tpu.dot_dimension_numbers<[1], [0], [0], [1], [0, 0, 1, 1], [], []>} : vector<16x32xf32>, vector<32x24xf32>, vector<16x24xf32> -> vector<16x24xf32>
    %c0_40 = arith.constant 0 : index
    %c0_41 = arith.constant 0 : index
    %298 = vector.load %arg5[%c0_40, %c0_41] : memref<1x24xf32, #tpu.memory_space<vmem>>, vector<1x24xf32>
    %299 = vector.broadcast %298 : vector<1x24xf32> to vector<16x24xf32>
    %300 = arith.addf %297, %299 : vector<16x24xf32>
    %c0_42 = arith.constant 0 : index
    %c0_43 = arith.constant 0 : index
    %301 = vector.load %arg6[%c0_42, %c0_43] : memref<16x24xf32, #tpu.memory_space<vmem>>, vector<16x24xf32>
    tpu.vector_store %arg6[%c0_42, %c0_43], %300 {strides = array<i32>} : memref<16x24xf32, #tpu.memory_space<vmem>>, vector<16x24xf32>,
    %c0_44 = arith.constant 0 : index
    %c0_45 = arith.constant 0 : index
    %c0_46 = arith.constant 0 : index
    %302 = vector.load %arg7[%c0_44, %c0_45, %c0_46] : memref<2x2x32xf32, #tpu.memory_space<vmem>>, vector<1x2x32xf32>
    %303 = vector.shape_cast %302 : vector<1x2x32xf32> to vector<2x32xf32>
    %304 = vector.shape_cast %293 : vector<2x32xf32> to vector<1x2x32xf32>
    tpu.vector_store %arg7[%c0_44, %c0_45, %c0_46], %304 {strides = array<i32>} : memref<2x2x32xf32, #tpu.memory_space<vmem>>, vector<1x2x32xf32>,
    %c1_47 = arith.constant 1 : index
    %c0_48 = arith.constant 0 : index
    %c0_49 = arith.constant 0 : index
    %305 = vector.load %arg7[%c1_47, %c0_48, %c0_49] : memref<2x2x32xf32, #tpu.memory_space<vmem>>, vector<1x2x32xf32>
    %306 = vector.shape_cast %305 : vector<1x2x32xf32> to vector<2x32xf32>
    %307 = vector.shape_cast %294 : vector<2x32xf32> to vector<1x2x32xf32>
    tpu.vector_store %arg7[%c1_47, %c0_48, %c0_49], %307 {strides = array<i32>} : memref<2x2x32xf32, #tpu.memory_space<vmem>>, vector<1x2x32xf32>,
    return
  }
}

</mosaic_0001>

<llo_original>
// kernel: vae_decode_pallas.1
$region0: #{vae_decode_pallas.1}
  #allocation0 [shape = 'u32[]', space=smem, size = 0x4, offset = 0x4, fixed_abs, tag = 'smem constant byte address 0x4 - core index']
  #allocation1 [shape = 'u32[144,128]{1,0:T(1,128)}', space=vmem, size = 0x12000, scoped, tag = 'internal scratch']
  %s0 = inlined_call_operand.vmem [shape: f32[16,32], index: 0, kind: input, shape index: {}]
  %s1 = inlined_call_operand.vmem [shape: f32[4,32], index: 1, kind: input, shape index: {}]
  %s2 = inlined_call_operand.vmem [shape: f32[128,192], index: 2, kind: input, shape index: {}]
  %s3 = inlined_call_operand.vmem [shape: f32[2,192], index: 3, kind: input, shape index: {}]
  %s4 = inlined_call_operand.vmem [shape: f32[32,24], index: 4, kind: input, shape index: {}]
  %s5 = inlined_call_operand.vmem [shape: f32[1,24], index: 5, kind: input, shape index: {}]
  %s6 = inlined_call_operand.hbm [shape: f32[16,24], index: 6, kind: output, shape index: {0}]
  %s7 = inlined_call_operand.hbm [shape: f32[2,2,32], index: 7, kind: output, shape index: {1}]
  %8 = xla_tuple %s6, %s7
  %s9 = sld [smem:[#allocation0]]
  $region42: #{vae_decode_pallas.1} parent=0
    _
  %s11 = ssub.s32 1, %s9
  %s12 = scalar_select 0, %s11, %s9
  $region1: #{vae_decode_pallas.1} parent=0
    #allocation2 [shape = 'u8[8192]{0}', space=vmem, size = 0x2000, scoped, tag = 'output window, operand 0, single buffered']
    #allocation3 [shape = 's32[1]{0}', space=sflag, size = 0x4, scoped, tag = 'scoped memory for vae_decode_pallas.1']
    #allocation4 [shape = 'u8[2048]{0}', space=vmem, size = 0x800, scoped, tag = 'output window, operand 1, single buffered']
    #allocation5 [shape = 's32[1]{0}', space=sflag, size = 0x4, scoped, tag = 'scoped memory for vae_decode_pallas.1']
    %13 = vsyncpa [#allocation3], 0
    %14 = vsyncpa [#allocation5], 0
    // Predicated region
    $region2: #{vae_decode_pallas.1} parent=1 // pred_check
      _
    $region3: #{vae_decode_pallas.1} parent=1 // pred_check_branch
      %16 = sbr.rel (0) target = $region5
    $region4: #{vae_decode_pallas.1} parent=1 // pred_region
      _
    $region5: #{vae_decode_pallas.1} parent=1 // pred_fallthru
      _
    // Predicated region
    $region6: #{vae_decode_pallas.1} parent=1 // pred_check
      _
    $region7: #{vae_decode_pallas.1} parent=1 // pred_check_branch
      %18 = sbr.rel (0) target = $region9
    $region8: #{vae_decode_pallas.1} parent=1 // pred_region
      _
    $region9: #{vae_decode_pallas.1} parent=1 // pred_fallthru
      _
    // Predicated region
    $region10: #{vae_decode_pallas.1} parent=1 // pred_check
      _
    $region11: #{vae_decode_pallas.1} parent=1 // pred_check_branch
      %20 = sbr.rel (0) target = $region13
    $region12: #{vae_decode_pallas.1} parent=1 // pred_region
      _
    $region13: #{vae_decode_pallas.1} parent=1 // pred_fallthru
      _
    // Predicated region
    $region14: #{vae_decode_pallas.1} parent=1 // pred_check
      _
    $region15: #{vae_decode_pallas.1} parent=1 // pred_check_branch
      %22 = sbr.rel (0) target = $region17
    $region16: #{vae_decode_pallas.1} parent=1 // pred_region
      _
    $region17: #{vae_decode_pallas.1} parent=1 // pred_fallthru
      _
    // Predicated region
    $region18: #{vae_decode_pallas.1} parent=1 // pred_check
      _
    $region19: #{vae_decode_pallas.1} parent=1 // pred_check_branch
      %24 = sbr.rel (0) target = $region21
    $region20: #{vae_decode_pallas.1} parent=1 // pred_region
      _
    $region21: #{vae_decode_pallas.1} parent=1 // pred_fallthru
      _
    // Predicated region
    $region22: #{vae_decode_pallas.1} parent=1 // pred_check
      _
    $region23: #{vae_decode_pallas.1} parent=1 // pred_check_branch
      %26 = sbr.rel (0) target = $region25
    $region24: #{vae_decode_pallas.1} parent=1 // pred_region
      _
    $region25: #{vae_decode_pallas.1} parent=1 // pred_fallthru
      _
    %v27 = vld [vmem:[%s0] sm:$0xff]
    %v28 = vld [vmem:[%s0 + $0x8] sm:$0xff]
    %v29 = vld [vmem:[%s2] sm:$0xff]
    %v30 = vld [vmem:[%s2 + $0x8] sm:$0xff]
    %v31 = vld [vmem:[%s2 + $0x10] sm:$0xff]
    %v32 = vld [vmem:[%s2 + $0x18] sm:$0xff]
    %v33 = vld [vmem:[%s2 + $0x20] sm:$0xff]
    %v34 = vld [vmem:[%s2 + $0x28] sm:$0xff]
    %v35 = vld [vmem:[%s2 + $0x30] sm:$0xff]
    %v36 = vld [vmem:[%s2 + $0x38] sm:$0xff]
    %v37 = vld [vmem:[%s2 + $0x40] sm:$0xff]
    %v38 = vld [vmem:[%s2 + $0x48] sm:$0xff]
    %v39 = vld [vmem:[%s2 + $0x50] sm:$0xff]
    %v40 = vld [vmem:[%s2 + $0x58] sm:$0xff]
    %v41 = vld [vmem:[%s2 + $0x60] sm:$0xff]
    %v42 = vld [vmem:[%s2 + $0x68] sm:$0xff]
    %v43 = vld [vmem:[%s2 + $0x70] sm:$0xff]
    %v44 = vld [vmem:[%s2 + $0x78] sm:$0xff]
    %v45 = vld [vmem:[%s2 + $0x80] sm:$0xff]
    %v46 = vld [vmem:[%s2 + $0x88] sm:$0xff]
    %v47 = vld [vmem:[%s2 + $0x90] sm:$0xff]
    %v48 = vld [vmem:[%s2 + $0x98] sm:$0xff]
    %v49 = vld [vmem:[%s2 + $0xa0] sm:$0xff]
    %v50 = vld [vmem:[%s2 + $0xa8] sm:$0xff]
    %v51 = vld [vmem:[%s2 + $0xb0] sm:$0xff]
    %v52 = vld [vmem:[%s2 + $0xb8] sm:$0xff]
    %v53 = vld [vmem:[%s2 + $0xc0] sm:$0xff]
    %v54 = vld [vmem:[%s2 + $0xc8] sm:$0xff]
    %v55 = vld [vmem:[%s2 + $0xd0] sm:$0xff]
    %v56 = vld [vmem:[%s2 + $0xd8] sm:$0xff]
    %v57 = vld [vmem:[%s2 + $0xe0] sm:$0xff]
    %v58 = vld [vmem:[%s2 + $0xe8] sm:$0xff]
    %v59 = vld [vmem:[%s2 + $0xf0] sm:$0xff]
    %v60 = vld [vmem:[%s2 + $0xf8] sm:$0xff]
    %v61 = vld [vmem:[%s3] ss:$2 sm:$0x3]
    %v63 = vlaneseq
    %v64 = vshrl.u32 %v63, 7
    %v65 = vsub.s32 0, %v64
    %v66 = vrot.slane %v61, %v65
    %v67 = vlaneseq
    %v68 = vshrl.u32 %v67, 7
    %v69 = vsub.s32 1, %v68
    %v70 = vrot.slane %v61, %v69
    %s73 = scalar_lea.vmem %s3, 1
    %v74 = vld [vmem:[%s73] ss:$2 sm:$0x3]
    %v76 = vlaneseq
    %v77 = vshrl.u32 %v76, 7
    %v78 = vsub.s32 0, %v77
    %v79 = vrot.slane %v74, %v78
    %v80 = vlaneseq
    %v81 = vshrl.u32 %v80, 7
    %v82 = vsub.s32 1, %v81
    %v83 = vrot.slane %v74, %v82
    %vm86 = vcmask 1041408
    %v87 = vsel %vm86, %v66, %v79
    %v88 = vsel %vm86, %v70, %v83
    %v89 = vld [vmem:[%s1] sm:$0xf]
    %91 = vrot.lane.b32.xlu0 %v27, 96
    %v92 = vpop.permute.xlu0 %91
    %vm94 = vcmask 261120
    %v95 = vsel %vm94, %v89, 0.0
    %vm96 = vcmask 785408
    %v97 = vsel %vm96, %v95, %v92
    %v99 = vrot.slane %v89, 2
    %100 = vrot.lane.b32.xlu0 %v99, 32
    %v101 = vpop.permute.xlu0 %100
    %103 = vrot.lane.b32.xlu0 %v89, 64
    %v104 = vpop.permute.xlu0 %103
    %v106 = vsel %vm94, 0.0, %v101
    %vm107 = vcmask 523264
    %v108 = vsel %vm107, %v106, %v104
    %v109 = vsel %vm96, %v108, 0.0
    %v111 = vrot.slane %v109, 6
    %v113 = vsel %vm86, %v97, %v111
    %114 = vmatprep.subr.mxu0 %v30
    %115 = vmatpush1.msra.mxu0 %v29
    %116 = vmatprep.subr.mxu0 %v32
    %117 = vmatpush1.msra.mxu0 %v31
    %118 = vmatprep.subr.mxu0 %v34
    %119 = vmatpush1.msra.mxu0 %v33
    %120 = vmatprep.subr.mxu0 %v36
    %121 = vmatpush1.msra.mxu0 %v35
    %122 = vmatprep.subr.mxu0 %v38
    %123 = vmatpush1.msra.mxu0 %v37
    %124 = vmatprep.subr.mxu0 %v40
    %125 = vmatpush1.msra.mxu0 %v39
    %126 = vmatprep.subr.mxu0 %v42
    %127 = vmatpush1.msra.mxu0 %v41
    %128 = vmatprep.subr.mxu0 %v44
    %129 = vmatpush1.msra.mxu0 %v43
    %130 = vmatprep.subr.mxu0 %v46
    %131 = vmatpush1.msra.mxu0 %v45
    %132 = vmatprep.subr.mxu0 %v48
    %133 = vmatpush1.msra.mxu0 %v47
    %134 = vmatprep.subr.mxu0 %v50
    %135 = vmatpush1.msra.mxu0 %v49
    %136 = vmatprep.subr.mxu0 %v52
    %137 = vmatpush1.msra.mxu0 %v51
    %138 = vmatprep.subr.mxu0 %v54
    %139 = vmatpush1.msra.mxu0 %v53
    %140 = vmatprep.subr.mxu0 %v56
    %141 = vmatpush1.msra.mxu0 %v55
    %142 = vmatprep.subr.mxu0 %v58
    %143 = vmatpush1.msra.mxu0 %v57
    %144 = vmatprep.subr.mxu0 %v60
    %145 = vmatpush1.msra.mxu0 %v59
    %146 = vmatprep.subr.mxu0 0.0
    %147 = vmatpush1.msra.mxu0 0.0
    %148 = vmatprep.subr.mxu0 0.0
    %149 = vmatpush1.msra.mxu0 0.0
    %150 = vmatprep.subr.mxu0 0.0
    %151 = vmatpush1.msra.mxu0 0.0
    %152 = vmatprep.subr.mxu0 0.0
    %153 = vmatpush1.msra.mxu0 0.0
    %154 = vmatprep.subr.mxu0 0.0
    %155 = vmatpush1.msra.mxu0 0.0
    %156 = vmatprep.subr.mxu0 0.0
    %157 = vmatpush1.msra.mxu0 0.0
    %158 = vmatprep.subr.mxu0 0.0
    %159 = vmatpush1.msra.mxu0 0.0
    %160 = vmatprep.subr.mxu0 0.0
    %161 = vmatpush1.msra.mxu0 0.0
    %162 = vmatprep.subr.mxu0 0.0
    %163 = vmatpush1.msra.mxu0 0.0
    %164 = vmatprep.subr.mxu0 0.0
    %165 = vmatpush1.msra.mxu0 0.0
    %166 = vmatprep.subr.mxu0 0.0
    %167 = vmatpush1.msra.mxu0 0.0
    %168 = vmatprep.subr.mxu0 0.0
    %169 = vmatpush1.msra.mxu0 0.0
    %170 = vmatprep.subr.mxu0 0.0
    %171 = vmatpush1.msra.mxu0 0.0
    %172 = vmatprep.subr.mxu0 0.0
    %173 = vmatpush1.msra.mxu0 0.0
    %174 = vmatprep.subr.mxu0 0.0
    %175 = vmatpush1.msra.mxu0 0.0
    %176 = vmatprep.subr.mxu0 0.0
    %177 = vmatpush1.msra.mxu0 0.0
    %178 = vmatprep.mubr.f32.mxu0 0.0
    %179 = vmatmul.mubr.f32.gmra.mrb[0].mxu0 %v113
    %v180 = vpop.f32.mrb[0].mxu0
    %v181 = vadd.f32 %v87, %v180
    %v182 = vpop.f32.mrb[0].mxu0
    %v183 = vadd.f32 %v88, %v182
    %184 = vdwg.mxu0
    %186 = vrot.lane.b32.xlu0 %v181, 96
    %v187 = vpop.permute.xlu0 %186
    %v189 = vadd.f32 %v181, %v187
    %v190 = vadd.f32 %v183, %v187
    %v191 = vxor.u32 %v189, 2147483648
    %v192 = vxor.u32 %v190, 2147483648
    %v193 = vmul.f32 %v191, 1.442695
    %v194 = vpow.pop %v193
    %v195 = vmul.f32 %v192, 1.442695
    %v196 = vpow.pop %v195
    %v197 = vadd.f32 %v194, 1.0
    %v198 = vadd.f32 %v196, 1.0
    %v199 = vrcp.pop %v197
    %v200 = vmul.f32 1.0, %v199
    %v201 = vrcp.pop %v198
    %v202 = vmul.f32 1.0, %v201
    %203 = vrot.lane.b32.xlu0 %v181, 32
    %v204 = vpop.permute.xlu0 %203
    %v206 = vmul.f32 %v200, %v204
    %208 = vrot.lane.b32.xlu0 %v206, 64
    %v209 = vpop.permute.xlu0 %208
    %v211 = vadd.f32 %v183, %v209
    %v212 = vtanh.pop %v211
    %v213 = vsub.f32 1.0, %v202
    %215 = vrot.lane.b32.xlu0 %v212, 96
    %v216 = vpop.permute.xlu0 %215
    %v218 = vmul.f32 %v213, %v216
    %v219 = vmul.f32 %v202, %v89
    %v220 = vadd.f32 %v218, %v219
    %v221 = vsel %vm86, %v220, %v89
    %v222 = vrot.slane %v27, 2
    %223 = vrot.lane.b32.xlu0 %v222, 96
    %v224 = vpop.permute.xlu0 %223
    %v226 = vsel %vm94, %v221, 0.0
    %v227 = vsel %vm96, %v226, %v224
    %v229 = vrot.slane %v221, 2
    %230 = vrot.lane.b32.xlu0 %v229, 32
    %v231 = vpop.permute.xlu0 %230
    %233 = vrot.lane.b32.xlu0 %v221, 64
    %v234 = vpop.permute.xlu0 %233
    %v236 = vsel %vm94, 0.0, %v231
    %v237 = vsel %vm107, %v236, %v234
    %v238 = vsel %vm96, %v237, 0.0
    %v240 = vrot.slane %v238, 6
    %v242 = vsel %vm86, %v227, %v240
    %243 = vmatprep.subr.mxu0 %v30
    %244 = vmatpush1.msra.mxu0 %v29
    %245 = vmatprep.subr.mxu0 %v32
    %246 = vmatpush1.msra.mxu0 %v31
    %247 = vmatprep.subr.mxu0 %v34
    %248 = vmatpush1.msra.mxu0 %v33
    %249 = vmatprep.subr.mxu0 %v36
    %250 = vmatpush1.msra.mxu0 %v35
    %251 = vmatprep.subr.mxu0 %v38
    %252 = vmatpush1.msra.mxu0 %v37
    %253 = vmatprep.subr.mxu0 %v40
    %254 = vmatpush1.msra.mxu0 %v39
    %255 = vmatprep.subr.mxu0 %v42
    %256 = vmatpush1.msra.mxu0 %v41
    %257 = vmatprep.subr.mxu0 %v44
    %258 = vmatpush1.msra.mxu0 %v43
    %259 = vmatprep.subr.mxu0 %v46
    %260 = vmatpush1.msra.mxu0 %v45
    %261 = vmatprep.subr.mxu0 %v48
    %262 = vmatpush1.msra.mxu0 %v47
    %263 = vmatprep.subr.mxu0 %v50
    %264 = vmatpush1.msra.mxu0 %v49
    %265 = vmatprep.subr.mxu0 %v52
    %266 = vmatpush1.msra.mxu0 %v51
    %267 = vmatprep.subr.mxu0 %v54
    %268 = vmatpush1.msra.mxu0 %v53
    %269 = vmatprep.subr.mxu0 %v56
    %270 = vmatpush1.msra.mxu0 %v55
    %271 = vmatprep.subr.mxu0 %v58
    %272 = vmatpush1.msra.mxu0 %v57
    %273 = vmatprep.subr.mxu0 %v60
    %274 = vmatpush1.msra.mxu0 %v59
    %275 = vmatprep.subr.mxu0 0.0
    %276 = vmatpush1.msra.mxu0 0.0
    %277 = vmatprep.subr.mxu0 0.0
    %278 = vmatpush1.msra.mxu0 0.0
    %279 = vmatprep.subr.mxu0 0.0
    %280 = vmatpush1.msra.mxu0 0.0
    %281 = vmatprep.subr.mxu0 0.0
    %282 = vmatpush1.msra.mxu0 0.0
    %283 = vmatprep.subr.mxu0 0.0
    %284 = vmatpush1.msra.mxu0 0.0
    %285 = vmatprep.subr.mxu0 0.0
    %286 = vmatpush1.msra.mxu0 0.0
    %287 = vmatprep.subr.mxu0 0.0
    %288 = vmatpush1.msra.mxu0 0.0
    %289 = vmatprep.subr.mxu0 0.0
    %290 = vmatpush1.msra.mxu0 0.0
    %291 = vmatprep.subr.mxu0 0.0
    %292 = vmatpush1.msra.mxu0 0.0
    %293 = vmatprep.subr.mxu0 0.0
    %294 = vmatpush1.msra.mxu0 0.0
    %295 = vmatprep.subr.mxu0 0.0
    %296 = vmatpush1.msra.mxu0 0.0
    %297 = vmatprep.subr.mxu0 0.0
    %298 = vmatpush1.msra.mxu0 0.0
    %299 = vmatprep.subr.mxu0 0.0
    %300 = vmatpush1.msra.mxu0 0.0
    %301 = vmatprep.subr.mxu0 0.0
    %302 = vmatpush1.msra.mxu0 0.0
    %303 = vmatprep.subr.mxu0 0.0
    %304 = vmatpush1.msra.mxu0 0.0
    %305 = vmatprep.subr.mxu0 0.0
    %306 = vmatpush1.msra.mxu0 0.0
    %307 = vmatprep.mubr.f32.mxu0 0.0
    %308 = vmatmul.mubr.f32.gmra.mrb[0].mxu0 %v242
    %v309 = vpop.f32.mrb[0].mxu0
    %v310 = vadd.f32 %v87, %v309
    %v311 = vpop.f32.mrb[0].mxu0
    %v312 = vadd.f32 %v88, %v311
    %313 = vdwg.mxu0
    %315 = vrot.lane.b32.xlu0 %v310, 96
    %v316 = vpop.permute.xlu0 %315
    %v318 = vadd.f32 %v310, %v316
    %v319 = vadd.f32 %v312, %v316
    %v320 = vxor.u32 %v318, 2147483648
    %v321 = vxor.u32 %v319, 2147483648
    %v322 = vmul.f32 %v320, 1.442695
    %v323 = vpow.pop %v322
    %v324 = vmul.f32 %v321, 1.442695
    %v325 = vpow.pop %v324
    %v326 = vadd.f32 %v323, 1.0
    %v327 = vadd.f32 %v325, 1.0
    %v328 = vrcp.pop %v326
    %v329 = vmul.f32 1.0, %v328
    %v330 = vrcp.pop %v327
    %v331 = vmul.f32 1.0, %v330
    %332 = vrot.lane.b32.xlu0 %v310, 32
    %v333 = vpop.permute.xlu0 %332
    %v335 = vmul.f32 %v329, %v333
    %337 = vrot.lane.b32.xlu0 %v335, 64
    %v338 = vpop.permute.xlu0 %337
    %v340 = vadd.f32 %v312, %v338
    %v341 = vtanh.pop %v340
    %v342 = vsub.f32 1.0, %v331
    %344 = vrot.lane.b32.xlu0 %v341, 96
    %v345 = vpop.permute.xlu0 %344
    %v347 = vmul.f32 %v342, %v345
    %v348 = vmul.f32 %v331, %v221
    %v349 = vadd.f32 %v347, %v348
    %v350 = vrot.slane %v27, 4
    %351 = vrot.lane.b32.xlu0 %v350, 96
    %v352 = vpop.permute.xlu0 %351
    %v354 = vsel %vm94, %v349, 0.0
    %v355 = vsel %vm96, %v354, %v352
    %v357 = vrot.slane %v349, 2
    %358 = vrot.lane.b32.xlu0 %v357, 32
    %v359 = vpop.permute.xlu0 %358
    %361 = vrot.lane.b32.xlu0 %v349, 64
    %v362 = vpop.permute.xlu0 %361
    %v364 = vsel %vm94, 0.0, %v359
    %v365 = vsel %vm107, %v364, %v362
    %v366 = vsel %vm96, %v365, 0.0
    %v368 = vrot.slane %v366, 6
    %v370 = vsel %vm86, %v355, %v368
    %371 = vmatprep.subr.mxu0 %v30
    %372 = vmatpush1.msra.mxu0 %v29
    %373 = vmatprep.subr.mxu0 %v32
    %374 = vmatpush1.msra.mxu0 %v31
    %375 = vmatprep.subr.mxu0 %v34
    %376 = vmatpush1.msra.mxu0 %v33
    %377 = vmatprep.subr.mxu0 %v36
    %378 = vmatpush1.msra.mxu0 %v35
    %379 = vmatprep.subr.mxu0 %v38
    %380 = vmatpush1.msra.mxu0 %v37
    %381 = vmatprep.subr.mxu0 %v40
    %382 = vmatpush1.msra.mxu0 %v39
    %383 = vmatprep.subr.mxu0 %v42
    %384 = vmatpush1.msra.mxu0 %v41
    %385 = vmatprep.subr.mxu0 %v44
    %386 = vmatpush1.msra.mxu0 %v43
    %387 = vmatprep.subr.mxu0 %v46
    %388 = vmatpush1.msra.mxu0 %v45
    %389 = vmatprep.subr.mxu0 %v48
    %390 = vmatpush1.msra.mxu0 %v47
    %391 = vmatprep.subr.mxu0 %v50
    %392 = vmatpush1.msra.mxu0 %v49
    %393 = vmatprep.subr.mxu0 %v52
    %394 = vmatpush1.msra.mxu0 %v51
    %395 = vmatprep.subr.mxu0 %v54
    %396 = vmatpush1.msra.mxu0 %v53
    %397 = vmatprep.subr.mxu0 %v56
    %398 = vmatpush1.msra.mxu0 %v55
    %399 = vmatprep.subr.mxu0 %v58
    %400 = vmatpush1.msra.mxu0 %v57
    %401 = vmatprep.subr.mxu0 %v60
    %402 = vmatpush1.msra.mxu0 %v59
    %403 = vmatprep.subr.mxu0 0.0
    %404 = vmatpush1.msra.mxu0 0.0
    %405 = vmatprep.subr.mxu0 0.0
    %406 = vmatpush1.msra.mxu0 0.0
    %407 = vmatprep.subr.mxu0 0.0
    %408 = vmatpush1.msra.mxu0 0.0
    %409 = vmatprep.subr.mxu0 0.0
    %410 = vmatpush1.msra.mxu0 0.0
    %411 = vmatprep.subr.mxu0 0.0
    %412 = vmatpush1.msra.mxu0 0.0
    %413 = vmatprep.subr.mxu0 0.0
    %414 = vmatpush1.msra.mxu0 0.0
    %415 = vmatprep.subr.mxu0 0.0
    %416 = vmatpush1.msra.mxu0 0.0
    %417 = vmatprep.subr.mxu0 0.0
    %418 = vmatpush1.msra.mxu0 0.0
    %419 = vmatprep.subr.mxu0 0.0
    %420 = vmatpush1.msra.mxu0 0.0
    %421 = vmatprep.subr.mxu0 0.0
    %422 = vmatpush1.msra.mxu0 0.0
    %423 = vmatprep.subr.mxu0 0.0
    %424 = vmatpush1.msra.mxu0 0.0
    %425 = vmatprep.subr.mxu0 0.0
    %426 = vmatpush1.msra.mxu0 0.0
    %427 = vmatprep.subr.mxu0 0.0
    %428 = vmatpush1.msra.mxu0 0.0
    %429 = vmatprep.subr.mxu0 0.0
    %430 = vmatpush1.msra.mxu0 0.0
    %431 = vmatprep.subr.mxu0 0.0
    %432 = vmatpush1.msra.mxu0 0.0
    %433 = vmatprep.subr.mxu0 0.0
    %434 = vmatpush1.msra.mxu0 0.0
    %435 = vmatprep.mubr.f32.mxu0 0.0
    %436 = vmatmul.mubr.f32.gmra.mrb[0].mxu0 %v370
    %v437 = vpop.f32.mrb[0].mxu0
    %v438 = vadd.f32 %v87, %v437
    %v439 = vpop.f32.mrb[0].mxu0
    %v440 = vadd.f32 %v88, %v439
    %441 = vdwg.mxu0
    %443 = vrot.lane.b32.xlu0 %v438, 96
    %v444 = vpop.permute.xlu0 %443
    %v446 = vadd.f32 %v438, %v444
    %v447 = vadd.f32 %v440, %v444
    %v448 = vxor.u32 %v446, 2147483648
    %v449 = vxor.u32 %v447, 2147483648
    %v450 = vmul.f32 %v448, 1.442695
    %v451 = vpow.pop %v450
    %v452 = vmul.f32 %v449, 1.442695
    %v453 = vpow.pop %v452
    %v454 = vadd.f32 %v451, 1.0
    %v455 = vadd.f32 %v453, 1.0
    %v456 = vrcp.pop %v454
    %v457 = vmul.f32 1.0, %v456
    %v458 = vrcp.pop %v455
    %v459 = vmul.f32 1.0, %v458
    %460 = vrot.lane.b32.xlu0 %v438, 32
    %v461 = vpop.permute.xlu0 %460
    %v463 = vmul.f32 %v457, %v461
    %465 = vrot.lane.b32.xlu0 %v463, 64
    %v466 = vpop.permute.xlu0 %465
    %v468 = vadd.f32 %v440, %v466
    %v469 = vtanh.pop %v468
    %v470 = vsub.f32 1.0, %v459
    %472 = vrot.lane.b32.xlu0 %v469, 96
    %v473 = vpop.permute.xlu0 %472
    %v475 = vmul.f32 %v470, %v473
    %v476 = vmul.f32 %v459, %v349
    %v477 = vadd.f32 %v475, %v476
    %v478 = vrot.slane %v27, 6
    %479 = vrot.lane.b32.xlu0 %v478, 96
    %v480 = vpop.permute.xlu0 %479
    %v482 = vsel %vm94, %v477, 0.0
    %v483 = vsel %vm96, %v482, %v480
    %v485 = vrot.slane %v477, 2
    %486 = vrot.lane.b32.xlu0 %v485, 32
    %v487 = vpop.permute.xlu0 %486
    %489 = vrot.lane.b32.xlu0 %v477, 64
    %v490 = vpop.permute.xlu0 %489
    %v492 = vsel %vm94, 0.0, %v487
    %v493 = vsel %vm107, %v492, %v490
    %v494 = vsel %vm96, %v493, 0.0
    %v496 = vrot.slane %v494, 6
    %v498 = vsel %vm86, %v483, %v496
    %499 = vmatprep.subr.mxu0 %v30
    %500 = vmatpush1.msra.mxu0 %v29
    %501 = vmatprep.subr.mxu0 %v32
    %502 = vmatpush1.msra.mxu0 %v31
    %503 = vmatprep.subr.mxu0 %v34
    %504 = vmatpush1.msra.mxu0 %v33
    %505 = vmatprep.subr.mxu0 %v36
    %506 = vmatpush1.msra.mxu0 %v35
    %507 = vmatprep.subr.mxu0 %v38
    %508 = vmatpush1.msra.mxu0 %v37
    %509 = vmatprep.subr.mxu0 %v40
    %510 = vmatpush1.msra.mxu0 %v39
    %511 = vmatprep.subr.mxu0 %v42
    %512 = vmatpush1.msra.mxu0 %v41
    %513 = vmatprep.subr.mxu0 %v44
    %514 = vmatpush1.msra.mxu0 %v43
    %515 = vmatprep.subr.mxu0 %v46
    %516 = vmatpush1.msra.mxu0 %v45
    %517 = vmatprep.subr.mxu0 %v48
    %518 = vmatpush1.msra.mxu0 %v47
    %519 = vmatprep.subr.mxu0 %v50
    %520 = vmatpush1.msra.mxu0 %v49
    %521 = vmatprep.subr.mxu0 %v52
    %522 = vmatpush1.msra.mxu0 %v51
    %523 = vmatprep.subr.mxu0 %v54
    %524 = vmatpush1.msra.mxu0 %v53
    %525 = vmatprep.subr.mxu0 %v56
    %526 = vmatpush1.msra.mxu0 %v55
    %527 = vmatprep.subr.mxu0 %v58
    %528 = vmatpush1.msra.mxu0 %v57
    %529 = vmatprep.subr.mxu0 %v60
    %530 = vmatpush1.msra.mxu0 %v59
    %531 = vmatprep.subr.mxu0 0.0
    %532 = vmatpush1.msra.mxu0 0.0
    %533 = vmatprep.subr.mxu0 0.0
    %534 = vmatpush1.msra.mxu0 0.0
    %535 = vmatprep.subr.mxu0 0.0
    %536 = vmatpush1.msra.mxu0 0.0
    %537 = vmatprep.subr.mxu0 0.0
    %538 = vmatpush1.msra.mxu0 0.0
    %539 = vmatprep.subr.mxu0 0.0
    %540 = vmatpush1.msra.mxu0 0.0
    %541 = vmatprep.subr.mxu0 0.0
    %542 = vmatpush1.msra.mxu0 0.0
    %543 = vmatprep.subr.mxu0 0.0
    %544 = vmatpush1.msra.mxu0 0.0
    %545 = vmatprep.subr.mxu0 0.0
    %546 = vmatpush1.msra.mxu0 0.0
    %547 = vmatprep.subr.mxu0 0.0
    %548 = vmatpush1.msra.mxu0 0.0
    %549 = vmatprep.subr.mxu0 0.0
    %550 = vmatpush1.msra.mxu0 0.0
    %551 = vmatprep.subr.mxu0 0.0
    %552 = vmatpush1.msra.mxu0 0.0
    %553 = vmatprep.subr.mxu0 0.0
    %554 = vmatpush1.msra.mxu0 0.0
    %555 = vmatprep.subr.mxu0 0.0
    %556 = vmatpush1.msra.mxu0 0.0
    %557 = vmatprep.subr.mxu0 0.0
    %558 = vmatpush1.msra.mxu0 0.0
    %559 = vmatprep.subr.mxu0 0.0
    %560 = vmatpush1.msra.mxu0 0.0
    %561 = vmatprep.subr.mxu0 0.0
    %562 = vmatpush1.msra.mxu0 0.0
    %563 = vmatprep.mubr.f32.mxu0 0.0
    %564 = vmatmul.mubr.f32.gmra.mrb[0].mxu0 %v498
    %v565 = vpop.f32.mrb[0].mxu0
    %v566 = vadd.f32 %v87, %v565
    %v567 = vpop.f32.mrb[0].mxu0
    %v568 = vadd.f32 %v88, %v567
    %569 = vdwg.mxu0
    %571 = vrot.lane.b32.xlu0 %v566, 96
    %v572 = vpop.permute.xlu0 %571
    %v574 = vadd.f32 %v566, %v572
    %v575 = vadd.f32 %v568, %v572
    %v576 = vxor.u32 %v574, 2147483648
    %v577 = vxor.u32 %v575, 2147483648
    %v578 = vmul.f32 %v576, 1.442695
    %v579 = vpow.pop %v578
    %v580 = vmul.f32 %v577, 1.442695
    %v581 = vpow.pop %v580
    %v582 = vadd.f32 %v579, 1.0
    %v583 = vadd.f32 %v581, 1.0
    %v584 = vrcp.pop %v582
    %v585 = vmul.f32 1.0, %v584
    %v586 = vrcp.pop %v583
    %v587 = vmul.f32 1.0, %v586
    %588 = vrot.lane.b32.xlu0 %v566, 32
    %v589 = vpop.permute.xlu0 %588
    %v591 = vmul.f32 %v585, %v589
    %593 = vrot.lane.b32.xlu0 %v591, 64
    %v594 = vpop.permute.xlu0 %593
    %v596 = vadd.f32 %v568, %v594
    %v597 = vtanh.pop %v596
    %v598 = vsub.f32 1.0, %v587
    %600 = vrot.lane.b32.xlu0 %v597, 96
    %v601 = vpop.permute.xlu0 %600
    %v603 = vmul.f32 %v598, %v601
    %v604 = vmul.f32 %v587, %v477
    %v605 = vadd.f32 %v603, %v604
    %607 = vrot.lane.b32.xlu0 %v28, 96
    %v608 = vpop.permute.xlu0 %607
    %v610 = vsel %vm94, %v605, 0.0
    %v611 = vsel %vm96, %v610, %v608
    %v613 = vrot.slane %v605, 2
    %614 = vrot.lane.b32.xlu0 %v613, 32
    %v615 = vpop.permute.xlu0 %614
    %617 = vrot.lane.b32.xlu0 %v605, 64
    %v618 = vpop.permute.xlu0 %617
    %v620 = vsel %vm94, 0.0, %v615
    %v621 = vsel %vm107, %v620, %v618
    %v622 = vsel %vm96, %v621, 0.0
    %v624 = vrot.slane %v622, 6
    %v626 = vsel %vm86, %v611, %v624
    %627 = vmatprep.subr.mxu0 %v30
    %628 = vmatpush1.msra.mxu0 %v29
    %629 = vmatprep.subr.mxu0 %v32
    %630 = vmatpush1.msra.mxu0 %v31
    %631 = vmatprep.subr.mxu0 %v34
    %632 = vmatpush1.msra.mxu0 %v33
    %633 = vmatprep.subr.mxu0 %v36
    %634 = vmatpush1.msra.mxu0 %v35
    %635 = vmatprep.subr.mxu0 %v38
    %636 = vmatpush1.msra.mxu0 %v37
    %637 = vmatprep.subr.mxu0 %v40
    %638 = vmatpush1.msra.mxu0 %v39
    %639 = vmatprep.subr.mxu0 %v42
    %640 = vmatpush1.msra.mxu0 %v41
    %641 = vmatprep.subr.mxu0 %v44
    %642 = vmatpush1.msra.mxu0 %v43
    %643 = vmatprep.subr.mxu0 %v46
    %644 = vmatpush1.msra.mxu0 %v45
    %645 = vmatprep.subr.mxu0 %v48
    %646 = vmatpush1.msra.mxu0 %v47
    %647 = vmatprep.subr.mxu0 %v50
    %648 = vmatpush1.msra.mxu0 %v49
    %649 = vmatprep.subr.mxu0 %v52
    %650 = vmatpush1.msra.mxu0 %v51
    %651 = vmatprep.subr.mxu0 %v54
    %652 = vmatpush1.msra.mxu0 %v53
    %653 = vmatprep.subr.mxu0 %v56
    %654 = vmatpush1.msra.mxu0 %v55
    %655 = vmatprep.subr.mxu0 %v58
    %656 = vmatpush1.msra.mxu0 %v57
    %657 = vmatprep.subr.mxu0 %v60
    %658 = vmatpush1.msra.mxu0 %v59
    %659 = vmatprep.subr.mxu0 0.0
    %660 = vmatpush1.msra.mxu0 0.0
    %661 = vmatprep.subr.mxu0 0.0
    %662 = vmatpush1.msra.mxu0 0.0
    %663 = vmatprep.subr.mxu0 0.0
    %664 = vmatpush1.msra.mxu0 0.0
    %665 = vmatprep.subr.mxu0 0.0
    %666 = vmatpush1.msra.mxu0 0.0
    %667 = vmatprep.subr.mxu0 0.0
    %668 = vmatpush1.msra.mxu0 0.0
    %669 = vmatprep.subr.mxu0 0.0
    %670 = vmatpush1.msra.mxu0 0.0
    %671 = vmatprep.subr.mxu0 0.0
    %672 = vmatpush1.msra.mxu0 0.0
    %673 = vmatprep.subr.mxu0 0.0
    %674 = vmatpush1.msra.mxu0 0.0
    %675 = vmatprep.subr.mxu0 0.0
    %676 = vmatpush1.msra.mxu0 0.0
    %677 = vmatprep.subr.mxu0 0.0
    %678 = vmatpush1.msra.mxu0 0.0
    %679 = vmatprep.subr.mxu0 0.0
    %680 = vmatpush1.msra.mxu0 0.0
    %681 = vmatprep.subr.mxu0 0.0
    %682 = vmatpush1.msra.mxu0 0.0
    %683 = vmatprep.subr.mxu0 0.0
    %684 = vmatpush1.msra.mxu0 0.0
    %685 = vmatprep.subr.mxu0 0.0
    %686 = vmatpush1.msra.mxu0 0.0
    %687 = vmatprep.subr.mxu0 0.0
    %688 = vmatpush1.msra.mxu0 0.0
    %689 = vmatprep.subr.mxu0 0.0
    %690 = vmatpush1.msra.mxu0 0.0
    %691 = vmatprep.mubr.f32.mxu0 0.0
    %692 = vmatmul.mubr.f32.gmra.mrb[0].mxu0 %v626
    %v693 = vpop.f32.mrb[0].mxu0
    %v694 = vadd.f32 %v87, %v693
    %v695 = vpop.f32.mrb[0].mxu0
    %v696 = vadd.f32 %v88, %v695
    %697 = vdwg.mxu0
    %699 = vrot.lane.b32.xlu0 %v694, 96
    %v700 = vpop.permute.xlu0 %699
    %v702 = vadd.f32 %v694, %v700
    %v703 = vadd.f32 %v696, %v700
    %v704 = vxor.u32 %v702, 2147483648
    %v705 = vxor.u32 %v703, 2147483648
    %v706 = vmul.f32 %v704, 1.442695
    %v707 = vpow.pop %v706
    %v708 = vmul.f32 %v705, 1.442695
    %v709 = vpow.pop %v708
    %v710 = vadd.f32 %v707, 1.0
    %v711 = vadd.f32 %v709, 1.0
    %v712 = vrcp.pop %v710
    %v713 = vmul.f32 1.0, %v712
    %v714 = vrcp.pop %v711
    %v715 = vmul.f32 1.0, %v714
    %716 = vrot.lane.b32.xlu0 %v694, 32
    %v717 = vpop.permute.xlu0 %716
    %v719 = vmul.f32 %v713, %v717
    %721 = vrot.lane.b32.xlu0 %v719, 64
    %v722 = vpop.permute.xlu0 %721
    %v724 = vadd.f32 %v696, %v722
    %v725 = vtanh.pop %v724
    %v726 = vsub.f32 1.0, %v715
    %728 = vrot.lane.b32.xlu0 %v725, 96
    %v729 = vpop.permute.xlu0 %728
    %v731 = vmul.f32 %v726, %v729
    %v732 = vmul.f32 %v715, %v605
    %v733 = vadd.f32 %v731, %v732
    %v734 = vrot.slane %v28, 2
    %735 = vrot.lane.b32.xlu0 %v734, 96
    %v736 = vpop.permute.xlu0 %735
    %v738 = vsel %vm94, %v733, 0.0
    %v739 = vsel %vm96, %v738, %v736
    %v741 = vrot.slane %v733, 2
    %742 = vrot.lane.b32.xlu0 %v741, 32
    %v743 = vpop.permute.xlu0 %742
    %745 = vrot.lane.b32.xlu0 %v733, 64
    %v746 = vpop.permute.xlu0 %745
    %v748 = vsel %vm94, 0.0, %v743
    %v749 = vsel %vm107, %v748, %v746
    %v750 = vsel %vm96, %v749, 0.0
    %v752 = vrot.slane %v750, 6
    %v754 = vsel %vm86, %v739, %v752
    %755 = vmatprep.subr.mxu0 %v30
    %756 = vmatpush1.msra.mxu0 %v29
    %757 = vmatprep.subr.mxu0 %v32
    %758 = vmatpush1.msra.mxu0 %v31
    %759 = vmatprep.subr.mxu0 %v34
    %760 = vmatpush1.msra.mxu0 %v33
    %761 = vmatprep.subr.mxu0 %v36
    %762 = vmatpush1.msra.mxu0 %v35
    %763 = vmatprep.subr.mxu0 %v38
    %764 = vmatpush1.msra.mxu0 %v37
    %765 = vmatprep.subr.mxu0 %v40
    %766 = vmatpush1.msra.mxu0 %v39
    %767 = vmatprep.subr.mxu0 %v42
    %768 = vmatpush1.msra.mxu0 %v41
    %769 = vmatprep.subr.mxu0 %v44
    %770 = vmatpush1.msra.mxu0 %v43
    %771 = vmatprep.subr.mxu0 %v46
    %772 = vmatpush1.msra.mxu0 %v45
    %773 = vmatprep.subr.mxu0 %v48
    %774 = vmatpush1.msra.mxu0 %v47
    %775 = vmatprep.subr.mxu0 %v50
    %776 = vmatpush1.msra.mxu0 %v49
    %777 = vmatprep.subr.mxu0 %v52
    %778 = vmatpush1.msra.mxu0 %v51
    %779 = vmatprep.subr.mxu0 %v54
    %780 = vmatpush1.msra.mxu0 %v53
    %781 = vmatprep.subr.mxu0 %v56
    %782 = vmatpush1.msra.mxu0 %v55
    %783 = vmatprep.subr.mxu0 %v58
    %784 = vmatpush1.msra.mxu0 %v57
    %785 = vmatprep.subr.mxu0 %v60
    %786 = vmatpush1.msra.mxu0 %v59
    %787 = vmatprep.subr.mxu0 0.0
    %788 = vmatpush1.msra.mxu0 0.0
    %789 = vmatprep.subr.mxu0 0.0
    %790 = vmatpush1.msra.mxu0 0.0
    %791 = vmatprep.subr.mxu0 0.0
    %792 = vmatpush1.msra.mxu0 0.0
    %793 = vmatprep.subr.mxu0 0.0
    %794 = vmatpush1.msra.mxu0 0.0
    %795 = vmatprep.subr.mxu0 0.0
    %796 = vmatpush1.msra.mxu0 0.0
    %797 = vmatprep.subr.mxu0 0.0
    %798 = vmatpush1.msra.mxu0 0.0
    %799 = vmatprep.subr.mxu0 0.0
    %800 = vmatpush1.msra.mxu0 0.0
    %801 = vmatprep.subr.mxu0 0.0
    %802 = vmatpush1.msra.mxu0 0.0
    %803 = vmatprep.subr.mxu0 0.0
    %804 = vmatpush1.msra.mxu0 0.0
    %805 = vmatprep.subr.mxu0 0.0
    %806 = vmatpush1.msra.mxu0 0.0
    %807 = vmatprep.subr.mxu0 0.0
    %808 = vmatpush1.msra.mxu0 0.0
    %809 = vmatprep.subr.mxu0 0.0
    %810 = vmatpush1.msra.mxu0 0.0
    %811 = vmatprep.subr.mxu0 0.0
    %812 = vmatpush1.msra.mxu0 0.0
    %813 = vmatprep.subr.mxu0 0.0
    %814 = vmatpush1.msra.mxu0 0.0
    %815 = vmatprep.subr.mxu0 0.0
    %816 = vmatpush1.msra.mxu0 0.0
    %817 = vmatprep.subr.mxu0 0.0
    %818 = vmatpush1.msra.mxu0 0.0
    %819 = vmatprep.mubr.f32.mxu0 0.0
    %820 = vmatmul.mubr.f32.gmra.mrb[0].mxu0 %v754
    %v821 = vpop.f32.mrb[0].mxu0
    %v822 = vadd.f32 %v87, %v821
    %v823 = vpop.f32.mrb[0].mxu0
    %v824 = vadd.f32 %v88, %v823
    %825 = vdwg.mxu0
    %827 = vrot.lane.b32.xlu0 %v822, 96
    %v828 = vpop.permute.xlu0 %827
    %v830 = vadd.f32 %v822, %v828
    %v831 = vadd.f32 %v824, %v828
    %v832 = vxor.u32 %v830, 2147483648
    %v833 = vxor.u32 %v831, 2147483648
    %v834 = vmul.f32 %v832, 1.442695
    %v835 = vpow.pop %v834
    %v836 = vmul.f32 %v833, 1.442695
    %v837 = vpow.pop %v836
    %v838 = vadd.f32 %v835, 1.0
    %v839 = vadd.f32 %v837, 1.0
    %v840 = vrcp.pop %v838
    %v841 = vmul.f32 1.0, %v840
    %v842 = vrcp.pop %v839
    %v843 = vmul.f32 1.0, %v842
    %844 = vrot.lane.b32.xlu0 %v822, 32
    %v845 = vpop.permute.xlu0 %844
    %v847 = vmul.f32 %v841, %v845
    %849 = vrot.lane.b32.xlu0 %v847, 64
    %v850 = vpop.permute.xlu0 %849
    %v852 = vadd.f32 %v824, %v850
    %v853 = vtanh.pop %v852
    %v854 = vsub.f32 1.0, %v843
    %856 = vrot.lane.b32.xlu0 %v853, 96
    %v857 = vpop.permute.xlu0 %856
    %v859 = vmul.f32 %v854, %v857
    %v860 = vmul.f32 %v843, %v733
    %v861 = vadd.f32 %v859, %v860
    %v862 = vrot.slane %v28, 4
    %863 = vrot.lane.b32.xlu0 %v862, 96
    %v864 = vpop.permute.xlu0 %863
    %v866 = vsel %vm94, %v861, 0.0
    %v867 = vsel %vm96, %v866, %v864
    %v869 = vrot.slane %v861, 2
    %870 = vrot.lane.b32.xlu0 %v869, 32
    %v871 = vpop.permute.xlu0 %870
    %873 = vrot.lane.b32.xlu0 %v861, 64
    %v874 = vpop.permute.xlu0 %873
    %v876 = vsel %vm94, 0.0, %v871
    %v877 = vsel %vm107, %v876, %v874
    %v878 = vsel %vm96, %v877, 0.0
    %v880 = vrot.slane %v878, 6
    %v882 = vsel %vm86, %v867, %v880
    %883 = vmatprep.subr.mxu0 %v30
    %884 = vmatpush1.msra.mxu0 %v29
    %885 = vmatprep.subr.mxu0 %v32
    %886 = vmatpush1.msra.mxu0 %v31
    %887 = vmatprep.subr.mxu0 %v34
    %888 = vmatpush1.msra.mxu0 %v33
    %889 = vmatprep.subr.mxu0 %v36
    %890 = vmatpush1.msra.mxu0 %v35
    %891 = vmatprep.subr.mxu0 %v38
    %892 = vmatpush1.msra.mxu0 %v37
    %893 = vmatprep.subr.mxu0 %v40
    %894 = vmatpush1.msra.mxu0 %v39
    %895 = vmatprep.subr.mxu0 %v42
    %896 = vmatpush1.msra.mxu0 %v41
    %897 = vmatprep.subr.mxu0 %v44
    %898 = vmatpush1.msra.mxu0 %v43
    %899 = vmatprep.subr.mxu0 %v46
    %900 = vmatpush1.msra.mxu0 %v45
    %901 = vmatprep.subr.mxu0 %v48
    %902 = vmatpush1.msra.mxu0 %v47
    %903 = vmatprep.subr.mxu0 %v50
    %904 = vmatpush1.msra.mxu0 %v49
    %905 = vmatprep.subr.mxu0 %v52
    %906 = vmatpush1.msra.mxu0 %v51
    %907 = vmatprep.subr.mxu0 %v54
    %908 = vmatpush1.msra.mxu0 %v53
    %909 = vmatprep.subr.mxu0 %v56
    %910 = vmatpush1.msra.mxu0 %v55
    %911 = vmatprep.subr.mxu0 %v58
    %912 = vmatpush1.msra.mxu0 %v57
    %913 = vmatprep.subr.mxu0 %v60
    %914 = vmatpush1.msra.mxu0 %v59
    %915 = vmatprep.subr.mxu0 0.0
    %916 = vmatpush1.msra.mxu0 0.0
    %917 = vmatprep.subr.mxu0 0.0
    %918 = vmatpush1.msra.mxu0 0.0
    %919 = vmatprep.subr.mxu0 0.0
    %920 = vmatpush1.msra.mxu0 0.0
    %921 = vmatprep.subr.mxu0 0.0
    %922 = vmatpush1.msra.mxu0 0.0
    %923 = vmatprep.subr.mxu0 0.0
    %924 = vmatpush1.msra.mxu0 0.0
    %925 = vmatprep.subr.mxu0 0.0
    %926 = vmatpush1.msra.mxu0 0.0
    %927 = vmatprep.subr.mxu0 0.0
    %928 = vmatpush1.msra.mxu0 0.0
    %929 = vmatprep.subr.mxu0 0.0
    %930 = vmatpush1.msra.mxu0 0.0
    %931 = vmatprep.subr.mxu0 0.0
    %932 = vmatpush1.msra.mxu0 0.0
    %933 = vmatprep.subr.mxu0 0.0
    %934 = vmatpush1.msra.mxu0 0.0
    %935 = vmatprep.subr.mxu0 0.0
    %936 = vmatpush1.msra.mxu0 0.0
    %937 = vmatprep.subr.mxu0 0.0
    %938 = vmatpush1.msra.mxu0 0.0
    %939 = vmatprep.subr.mxu0 0.0
    %940 = vmatpush1.msra.mxu0 0.0
    %941 = vmatprep.subr.mxu0 0.0
    %942 = vmatpush1.msra.mxu0 0.0
    %943 = vmatprep.subr.mxu0 0.0
    %944 = vmatpush1.msra.mxu0 0.0
    %945 = vmatprep.subr.mxu0 0.0
    %946 = vmatpush1.msra.mxu0 0.0
    %947 = vmatprep.mubr.f32.mxu0 0.0
    %948 = vmatmul.mubr.f32.gmra.mrb[0].mxu0 %v882
    %v949 = vpop.f32.mrb[0].mxu0
    %v950 = vadd.f32 %v87, %v949
    %v951 = vpop.f32.mrb[0].mxu0
    %v952 = vadd.f32 %v88, %v951
    %953 = vdwg.mxu0
    %955 = vrot.lane.b32.xlu0 %v950, 96
    %v956 = vpop.permute.xlu0 %955
    %v958 = vadd.f32 %v950, %v956
    %v959 = vadd.f32 %v952, %v956
    %v960 = vxor.u32 %v958, 2147483648
    %v961 = vxor.u32 %v959, 2147483648
    %v962 = vmul.f32 %v960, 1.442695
    %v963 = vpow.pop %v962
    %v964 = vmul.f32 %v961, 1.442695
    %v965 = vpow.pop %v964
    %v966 = vadd.f32 %v963, 1.0
    %v967 = vadd.f32 %v965, 1.0
    %v968 = vrcp.pop %v966
    %v969 = vmul.f32 1.0, %v968
    %v970 = vrcp.pop %v967
    %v971 = vmul.f32 1.0, %v970
    %972 = vrot.lane.b32.xlu0 %v950, 32
    %v973 = vpop.permute.xlu0 %972
    %v975 = vmul.f32 %v969, %v973
    %977 = vrot.lane.b32.xlu0 %v975, 64
    %v978 = vpop.permute.xlu0 %977
    %v980 = vadd.f32 %v952, %v978
    %v981 = vtanh.pop %v980
    %v982 = vsub.f32 1.0, %v971
    %984 = vrot.lane.b32.xlu0 %v981, 96
    %v985 = vpop.permute.xlu0 %984
    %v987 = vmul.f32 %v982, %v985
    %v988 = vmul.f32 %v971, %v861
    %v989 = vadd.f32 %v987, %v988
    %v990 = vrot.slane %v28, 6
    %991 = vrot.lane.b32.xlu0 %v990, 96
    %v992 = vpop.permute.xlu0 %991
    %v994 = vsel %vm94, %v989, 0.0
    %v995 = vsel %vm96, %v994, %v992
    %v997 = vrot.slane %v989, 2
    %998 = vrot.lane.b32.xlu0 %v997, 32
    %v999 = vpop.permute.xlu0 %998
    %1001 = vrot.lane.b32.xlu0 %v989, 64
    %v1002 = vpop.permute.xlu0 %1001
    %v1004 = vsel %vm94, 0.0, %v999
    %v1005 = vsel %vm107, %v1004, %v1002
    %v1006 = vsel %vm96, %v1005, 0.0
    %v1008 = vrot.slane %v1006, 6
    %v1010 = vsel %vm86, %v995, %v1008
    %1011 = vmatprep.subr.mxu0 %v30
    %1012 = vmatpush1.msra.mxu0 %v29
    %1013 = vmatprep.subr.mxu0 %v32
    %1014 = vmatpush1.msra.mxu0 %v31
    %1015 = vmatprep.subr.mxu0 %v34
    %1016 = vmatpush1.msra.mxu0 %v33
    %1017 = vmatprep.subr.mxu0 %v36
    %1018 = vmatpush1.msra.mxu0 %v35
    %1019 = vmatprep.subr.mxu0 %v38
    %1020 = vmatpush1.msra.mxu0 %v37
    %1021 = vmatprep.subr.mxu0 %v40
    %1022 = vmatpush1.msra.mxu0 %v39
    %1023 = vmatprep.subr.mxu0 %v42
    %1024 = vmatpush1.msra.mxu0 %v41
    %1025 = vmatprep.subr.mxu0 %v44
    %1026 = vmatpush1.msra.mxu0 %v43
    %1027 = vmatprep.subr.mxu0 %v46
    %1028 = vmatpush1.msra.mxu0 %v45
    %1029 = vmatprep.subr.mxu0 %v48
    %1030 = vmatpush1.msra.mxu0 %v47
    %1031 = vmatprep.subr.mxu0 %v50
    %1032 = vmatpush1.msra.mxu0 %v49
    %1033 = vmatprep.subr.mxu0 %v52
    %1034 = vmatpush1.msra.mxu0 %v51
    %1035 = vmatprep.subr.mxu0 %v54
    %1036 = vmatpush1.msra.mxu0 %v53
    %1037 = vmatprep.subr.mxu0 %v56
    %1038 = vmatpush1.msra.mxu0 %v55
    %1039 = vmatprep.subr.mxu0 %v58
    %1040 = vmatpush1.msra.mxu0 %v57
    %1041 = vmatprep.subr.mxu0 %v60
    %1042 = vmatpush1.msra.mxu0 %v59
    %1043 = vmatprep.subr.mxu0 0.0
    %1044 = vmatpush1.msra.mxu0 0.0
    %1045 = vmatprep.subr.mxu0 0.0
    %1046 = vmatpush1.msra.mxu0 0.0
    %1047 = vmatprep.subr.mxu0 0.0
    %1048 = vmatpush1.msra.mxu0 0.0
    %1049 = vmatprep.subr.mxu0 0.0
    %1050 = vmatpush1.msra.mxu0 0.0
    %1051 = vmatprep.subr.mxu0 0.0
    %1052 = vmatpush1.msra.mxu0 0.0
    %1053 = vmatprep.subr.mxu0 0.0
    %1054 = vmatpush1.msra.mxu0 0.0
    %1055 = vmatprep.subr.mxu0 0.0
    %1056 = vmatpush1.msra.mxu0 0.0
    %1057 = vmatprep.subr.mxu0 0.0
    %1058 = vmatpush1.msra.mxu0 0.0
    %1059 = vmatprep.subr.mxu0 0.0
    %1060 = vmatpush1.msra.mxu0 0.0
    %1061 = vmatprep.subr.mxu0 0.0
    %1062 = vmatpush1.msra.mxu0 0.0
    %1063 = vmatprep.subr.mxu0 0.0
    %1064 = vmatpush1.msra.mxu0 0.0
    %1065 = vmatprep.subr.mxu0 0.0
    %1066 = vmatpush1.msra.mxu0 0.0
    %1067 = vmatprep.subr.mxu0 0.0
    %1068 = vmatpush1.msra.mxu0 0.0
    %1069 = vmatprep.subr.mxu0 0.0
    %1070 = vmatpush1.msra.mxu0 0.0
    %1071 = vmatprep.subr.mxu0 0.0
    %1072 = vmatpush1.msra.mxu0 0.0
    %1073 = vmatprep.subr.mxu0 0.0
    %1074 = vmatpush1.msra.mxu0 0.0
    %1075 = vmatprep.mubr.f32.mxu0 0.0
    %1076 = vmatmul.mubr.f32.gmra.mrb[0].mxu0 %v1010
    %v1077 = vpop.f32.mrb[0].mxu0
    %v1078 = vadd.f32 %v87, %v1077
    %v1079 = vpop.f32.mrb[0].mxu0
    %v1080 = vadd.f32 %v88, %v1079
    %1081 = vdwg.mxu0
    %1083 = vrot.lane.b32.xlu0 %v1078, 96
    %v1084 = vpop.permute.xlu0 %1083
    %v1086 = vadd.f32 %v1078, %v1084
    %v1087 = vadd.f32 %v1080, %v1084
    %v1088 = vxor.u32 %v1086, 2147483648
    %v1089 = vxor.u32 %v1087, 2147483648
    %v1090 = vmul.f32 %v1088, 1.442695
    %v1091 = vpow.pop %v1090
    %v1092 = vmul.f32 %v1089, 1.442695
    %v1093 = vpow.pop %v1092
    %v1094 = vadd.f32 %v1091, 1.0
    %v1095 = vadd.f32 %v1093, 1.0
    %v1096 = vrcp.pop %v1094
    %v1097 = vmul.f32 1.0, %v1096
    %v1098 = vrcp.pop %v1095
    %v1099 = vmul.f32 1.0, %v1098
    %1100 = vrot.lane.b32.xlu0 %v1078, 32
    %v1101 = vpop.permute.xlu0 %1100
    %v1103 = vmul.f32 %v1097, %v1101
    %1105 = vrot.lane.b32.xlu0 %v1103, 64
    %v1106 = vpop.permute.xlu0 %1105
    %v1108 = vadd.f32 %v1080, %v1106
    %v1109 = vtanh.pop %v1108
    %v1110 = vsub.f32 1.0, %v1099
    %1112 = vrot.lane.b32.xlu0 %v1109, 96
    %v1113 = vpop.permute.xlu0 %1112
    %v1115 = vmul.f32 %v1110, %v1113
    %v1116 = vmul.f32 %v1099, %v989
    %v1117 = vadd.f32 %v1115, %v1116
    %v1118 = vsel %vm94, %v1117, 0.0
    %v1119 = vsel %vm96, %v1118, %v992
    %v1121 = vrot.slane %v1117, 2
    %1122 = vrot.lane.b32.xlu0 %v1121, 32
    %v1123 = vpop.permute.xlu0 %1122
    %1125 = vrot.lane.b32.xlu0 %v1117, 64
    %v1126 = vpop.permute.xlu0 %1125
    %v1128 = vsel %vm94, 0.0, %v1123
    %v1129 = vsel %vm107, %v1128, %v1126
    %v1130 = vsel %vm96, %v1129, 0.0
    %v1132 = vrot.slane %v1130, 6
    %v1134 = vsel %vm86, %v1119, %v1132
    %1135 = vmatprep.subr.mxu0 %v30
    %1136 = vmatpush1.msra.mxu0 %v29
    %1137 = vmatprep.subr.mxu0 %v32
    %1138 = vmatpush1.msra.mxu0 %v31
    %1139 = vmatprep.subr.mxu0 %v34
    %1140 = vmatpush1.msra.mxu0 %v33
    %1141 = vmatprep.subr.mxu0 %v36
    %1142 = vmatpush1.msra.mxu0 %v35
    %1143 = vmatprep.subr.mxu0 %v38
    %1144 = vmatpush1.msra.mxu0 %v37
    %1145 = vmatprep.subr.mxu0 %v40
    %1146 = vmatpush1.msra.mxu0 %v39
    %1147 = vmatprep.subr.mxu0 %v42
    %1148 = vmatpush1.msra.mxu0 %v41
    %1149 = vmatprep.subr.mxu0 %v44
    %1150 = vmatpush1.msra.mxu0 %v43
    %1151 = vmatprep.subr.mxu0 %v46
    %1152 = vmatpush1.msra.mxu0 %v45
    %1153 = vmatprep.subr.mxu0 %v48
    %1154 = vmatpush1.msra.mxu0 %v47
    %1155 = vmatprep.subr.mxu0 %v50
    %1156 = vmatpush1.msra.mxu0 %v49
    %1157 = vmatprep.subr.mxu0 %v52
    %1158 = vmatpush1.msra.mxu0 %v51
    %1159 = vmatprep.subr.mxu0 %v54
    %1160 = vmatpush1.msra.mxu0 %v53
    %1161 = vmatprep.subr.mxu0 %v56
    %1162 = vmatpush1.msra.mxu0 %v55
    %1163 = vmatprep.subr.mxu0 %v58
    %1164 = vmatpush1.msra.mxu0 %v57
    %1165 = vmatprep.subr.mxu0 %v60
    %1166 = vmatpush1.msra.mxu0 %v59
    %1167 = vmatprep.subr.mxu0 0.0
    %1168 = vmatpush1.msra.mxu0 0.0
    %1169 = vmatprep.subr.mxu0 0.0
    %1170 = vmatpush1.msra.mxu0 0.0
    %1171 = vmatprep.subr.mxu0 0.0
    %1172 = vmatpush1.msra.mxu0 0.0
    %1173 = vmatprep.subr.mxu0 0.0
    %1174 = vmatpush1.msra.mxu0 0.0
    %1175 = vmatprep.subr.mxu0 0.0
    %1176 = vmatpush1.msra.mxu0 0.0
    %1177 = vmatprep.subr.mxu0 0.0
    %1178 = vmatpush1.msra.mxu0 0.0
    %1179 = vmatprep.subr.mxu0 0.0
    %1180 = vmatpush1.msra.mxu0 0.0
    %1181 = vmatprep.subr.mxu0 0.0
    %1182 = vmatpush1.msra.mxu0 0.0
    %1183 = vmatprep.subr.mxu0 0.0
    %1184 = vmatpush1.msra.mxu0 0.0
    %1185 = vmatprep.subr.mxu0 0.0
    %1186 = vmatpush1.msra.mxu0 0.0
    %1187 = vmatprep.subr.mxu0 0.0
    %1188 = vmatpush1.msra.mxu0 0.0
    %1189 = vmatprep.subr.mxu0 0.0
    %1190 = vmatpush1.msra.mxu0 0.0
    %1191 = vmatprep.subr.mxu0 0.0
    %1192 = vmatpush1.msra.mxu0 0.0
    %1193 = vmatprep.subr.mxu0 0.0
    %1194 = vmatpush1.msra.mxu0 0.0
    %1195 = vmatprep.subr.mxu0 0.0
    %1196 = vmatpush1.msra.mxu0 0.0
    %1197 = vmatprep.subr.mxu0 0.0
    %1198 = vmatpush1.msra.mxu0 0.0
    %1199 = vmatprep.mubr.f32.mxu0 0.0
    %1200 = vmatmul.mubr.f32.gmra.mrb[0].mxu0 %v1134
    %v1201 = vpop.f32.mrb[0].mxu0
    %v1202 = vadd.f32 %v87, %v1201
    %v1203 = vpop.f32.mrb[0].mxu0
    %v1204 = vadd.f32 %v88, %v1203
    %1205 = vdwg.mxu0
    %1207 = vrot.lane.b32.xlu0 %v1202, 96
    %v1208 = vpop.permute.xlu0 %1207
    %v1210 = vadd.f32 %v1202, %v1208
    %v1211 = vadd.f32 %v1204, %v1208
    %v1212 = vxor.u32 %v1210, 2147483648
    %v1213 = vxor.u32 %v1211, 2147483648
    %v1214 = vmul.f32 %v1212, 1.442695
    %v1215 = vpow.pop %v1214
    %v1216 = vmul.f32 %v1213, 1.442695
    %v1217 = vpow.pop %v1216
    %v1218 = vadd.f32 %v1215, 1.0
    %v1219 = vadd.f32 %v1217, 1.0
    %v1220 = vrcp.pop %v1218
    %v1221 = vmul.f32 1.0, %v1220
    %v1222 = vrcp.pop %v1219
    %v1223 = vmul.f32 1.0, %v1222
    %1224 = vrot.lane.b32.xlu0 %v1202, 32
    %v1225 = vpop.permute.xlu0 %1224
    %v1227 = vmul.f32 %v1221, %v1225
    %1229 = vrot.lane.b32.xlu0 %v1227, 64
    %v1230 = vpop.permute.xlu0 %1229
    %v1232 = vadd.f32 %v1204, %v1230
    %v1233 = vtanh.pop %v1232
    %v1234 = vsub.f32 1.0, %v1223
    %1236 = vrot.lane.b32.xlu0 %v1233, 96
    %v1237 = vpop.permute.xlu0 %1236
    %v1239 = vmul.f32 %v1234, %v1237
    %v1240 = vmul.f32 %v1223, %v1117
    %v1241 = vadd.f32 %v1239, %v1240
    %v1243 = vrot.slane %v605, 6
    %v1245 = vrot.slane %v733, 4
    %v1248 = vrot.slane %v1117, 6
    %v1251 = vrot.slane %v1241, 4
    %v1253 = vsel %vm86, %v357, %v477
    %vm1254 = vcmask 1043456
    %v1255 = vsel %vm1254, %v1253, %v1243
    %vm1256 = vcmask 1045504
    %v1257 = vsel %vm1256, %v1255, %v1245
    %v1258 = vsel %vm86, %v869, %v989
    %v1259 = vsel %vm1254, %v1258, %v1248
    %v1260 = vsel %vm1256, %v1259, %v1251
    %v1261 = vld [vmem:[%s4] sm:$0xff]
    %v1262 = vld [vmem:[%s4 + $0x8] sm:$0xff]
    %v1263 = vld [vmem:[%s4 + $0x10] sm:$0xff]
    %v1264 = vld [vmem:[%s4 + $0x18] sm:$0xff]
    %v1265 = vld [vmem:[%s5] sm:$0x1]
    %v1267 = vlaneseq
    %v1268 = vshrl.u32 %v1267, 7
    %v1269 = vsub.s32 0, %v1268
    %v1270 = vrot.slane %v1265, %v1269
    %v1273 = vsel %vm94, %v1257, 0
    %v1276 = vsel %vm94, %v1260, 0
    %1278 = vmatprep.subr.mxu0 0.0
    %1279 = vmatpush1.msra.mxu0 %v1261
    %1280 = vmatprep.subr.mxu0 0.0
    %1281 = vmatpush1.msra.mxu0 %v1262
    %1282 = vmatprep.subr.mxu0 0.0
    %1283 = vmatpush1.msra.mxu0 %v1263
    %1284 = vmatprep.subr.mxu0 0.0
    %1285 = vmatpush1.msra.mxu0 %v1264
    %1286 = vmatprep.subr.mxu0 0.0
    %1287 = vmatpush1.msra.mxu0 0.0
    %1288 = vmatprep.subr.mxu0 0.0
    %1289 = vmatpush1.msra.mxu0 0.0
    %1290 = vmatprep.subr.mxu0 0.0
    %1291 = vmatpush1.msra.mxu0 0.0
    %1292 = vmatprep.subr.mxu0 0.0
    %1293 = vmatpush1.msra.mxu0 0.0
    %1294 = vmatprep.subr.mxu0 0.0
    %1295 = vmatpush1.msra.mxu0 0.0
    %1296 = vmatprep.subr.mxu0 0.0
    %1297 = vmatpush1.msra.mxu0 0.0
    %1298 = vmatprep.subr.mxu0 0.0
    %1299 = vmatpush1.msra.mxu0 0.0
    %1300 = vmatprep.subr.mxu0 0.0
    %1301 = vmatpush1.msra.mxu0 0.0
    %1302 = vmatprep.subr.mxu0 0.0
    %1303 = vmatpush1.msra.mxu0 0.0
    %1304 = vmatprep.subr.mxu0 0.0
    %1305 = vmatpush1.msra.mxu0 0.0
    %1306 = vmatprep.subr.mxu0 0.0
    %1307 = vmatpush1.msra.mxu0 0.0
    %1308 = vmatprep.subr.mxu0 0.0
    %1309 = vmatpush1.msra.mxu0 0.0
    %1310 = vmatprep.subr.mxu0 0.0
    %1311 = vmatpush1.msra.mxu0 0.0
    %1312 = vmatprep.subr.mxu0 0.0
    %1313 = vmatpush1.msra.mxu0 0.0
    %1314 = vmatprep.subr.mxu0 0.0
    %1315 = vmatpush1.msra.mxu0 0.0
    %1316 = vmatprep.subr.mxu0 0.0
    %1317 = vmatpush1.msra.mxu0 0.0
    %1318 = vmatprep.subr.mxu0 0.0
    %1319 = vmatpush1.msra.mxu0 0.0
    %1320 = vmatprep.subr.mxu0 0.0
    %1321 = vmatpush1.msra.mxu0 0.0
    %1322 = vmatprep.subr.mxu0 0.0
    %1323 = vmatpush1.msra.mxu0 0.0
    %1324 = vmatprep.subr.mxu0 0.0
    %1325 = vmatpush1.msra.mxu0 0.0
    %1326 = vmatprep.subr.mxu0 0.0
    %1327 = vmatpush1.msra.mxu0 0.0
    %1328 = vmatprep.subr.mxu0 0.0
    %1329 = vmatpush1.msra.mxu0 0.0
    %1330 = vmatprep.subr.mxu0 0.0
    %1331 = vmatpush1.msra.mxu0 0.0
    %1332 = vmatprep.subr.mxu0 0.0
    %1333 = vmatpush1.msra.mxu0 0.0
    %1334 = vmatprep.subr.mxu0 0.0
    %1335 = vmatpush1.msra.mxu0 0.0
    %1336 = vmatprep.subr.mxu0 0.0
    %1337 = vmatpush1.msra.mxu0 0.0
    %1338 = vmatprep.subr.mxu0 0.0
    %1339 = vmatpush1.msra.mxu0 0.0
    %1340 = vmatprep.subr.mxu0 0.0
    %1341 = vmatpush1.msra.mxu0 0.0
    %1342 = vmatprep.mubr.f32.mxu0 0.0
    %1343 = vmatmul.mubr.f32.gmra.mrb[0].mxu0 %v1273
    %v1344 = vpop.f32.mrb[0].mxu0
    %v1345 = vadd.f32 %v1270, %v1344
    %v1346 = vpop.f32.mrb[0].mxu0
    %1347 = vmatprep.mubr.f32.mxu0 0.0
    %1348 = vmatmul.mubr.f32.gmra.mrb[0].mxu0 %v1276
    %v1349 = vpop.f32.mrb[0].mxu0
    %v1350 = vadd.f32 %v1270, %v1349
    %v1351 = vpop.f32.mrb[0].mxu0
    %1352 = vdwg.mxu0
    %vm1353 = vcmask 195584
    %1354 = vst.msk [vmem:[#allocation2] sm:$0xff] %vm1353, %v1345
    %1355 = vst.msk [vmem:[#allocation2 + $0x8] sm:$0xff] %vm1353, %v1350
    %vm1356 = vcmask 254976
    %1357 = vst.msk [vmem:[#allocation4] sm:$0x3] %vm1356, %v1117
    %s1358 = scalar_lea.vmem [#allocation4], 2
    %vm1359 = vcmask 257026
    %1360 = vst.msk [vmem:[%s1358 - $0x2] sm:$0xc] %vm1359, %v1241
    // Predicated region
    $region26: #{vae_decode_pallas.1} parent=1 // pred_check
      _
    $region27: #{vae_decode_pallas.1} parent=1 // pred_check_branch
      %1362 = sbr.rel (0) target = $region29
    $region28: #{vae_decode_pallas.1} parent=1 // pred_region
      %s1364 = ssub.s32 256, 256
      %1365 = vsyncadd [#allocation3], %s1364
      %s1366 = sshll.u32 [#allocation2], 4
      %s1367 = int_to_ptr.vmem [resolvable:$true] %s1366
      %1372 = dma.vmem_to_hbm [thread:$0]  %s1367, 256, %s6, [#allocation3], 128, 128, 8
    $region29: #{vae_decode_pallas.1} parent=1 // pred_fallthru
      _
    // Predicated region
    $region30: #{vae_decode_pallas.1} parent=1 // pred_check
      _
    $region31: #{vae_decode_pallas.1} parent=1 // pred_check_branch
      %1374 = sbr.rel (0) target = $region33
    $region32: #{vae_decode_pallas.1} parent=1 // pred_region
      %s1376 = ssub.s32 64, 64
      %1377 = vsyncadd [#allocation5], %s1376
      %s1378 = sshll.u32 [#allocation4], 4
      %s1379 = int_to_ptr.vmem [resolvable:$true] %s1378
      %1384 = dma.vmem_to_hbm [thread:$0]  %s1379, 64, %s7, [#allocation5], 32, 32, 2
    $region33: #{vae_decode_pallas.1} parent=1 // pred_fallthru
      _
    // Predicated region
    $region34: #{vae_decode_pallas.1} parent=1 // pred_check
      _
    $region35: #{vae_decode_pallas.1} parent=1 // pred_check_branch
      %1386 = sbr.rel (0) target = $region37
    $region36: #{vae_decode_pallas.1} parent=1 // pred_region
      %1387 = dma.done [#allocation3], 256
    $region37: #{vae_decode_pallas.1} parent=1 // pred_fallthru
      _
    // Predicated region
    $region38: #{vae_decode_pallas.1} parent=1 // pred_check
      _
    $region39: #{vae_decode_pallas.1} parent=1 // pred_check_branch
      %1389 = sbr.rel (0) target = $region41
    $region40: #{vae_decode_pallas.1} parent=1 // pred_region
      %1390 = dma.done [#allocation5], 64
    $region41: #{vae_decode_pallas.1} parent=1 // pred_fallthru
      _
    %1391 = vsyncpa [#allocation3], 1
    %1392 = vsyncpa [#allocation5], 1

</llo_original>
